<compile_context>
chip_gen: v7x
topology: tpu7x:2x2x1
jax: 0.10.0
libtpu: 0.0.40
codegen_flags: <defaults>
</compile_context>

<pallas_src>
import jax
import jax.numpy as jnp
from jax.experimental import pallas as pl
from jax.experimental.pallas import tpu as pltpu

NODE_FEATURES = 27
HIDDEN_DIM = 64
LATENT_DIM = 32
N_NODES = 8
XPAD = 32            # node features padded 27 -> 32 lanes inside the input slab
OUT_ROWS = 16        # packed output tile rows (multiple of 8)

# vecs slab row indices (biases / LayerNorm gamma,beta / attention rows)
(R_BLR1, R_BO1, R_BLR2, R_BO2, R_BNG,
 R_DB1, R_DG1, R_DBE1, R_DB2, R_DG2, R_DBE2, R_DB3,
 R_RB1, R_RG1, R_RBE1, R_RB2,
 R_EB1, R_EG, R_EBE, R_EB2, R_ATT1, R_ATT2, R_EW2) = range(23)
VEC_ROWS = 24


# ----------------------------- in-kernel helpers -----------------------------

def _layernorm(x, gamma, beta, eps=1e-5):
    mu = jnp.mean(x, axis=-1, keepdims=True)
    var = jnp.mean((x - mu) ** 2, axis=-1, keepdims=True)
    return (x - mu) * jax.lax.rsqrt(var + eps) * gamma + beta


# --------------------------------- fused kernel -------------------------------

def fused_gvae_kernel(xin_ref, ei_ref, wbig_ref, wmed_ref, wout_ref, vecs_ref,
                      out_ref):
    N, F, H, L = N_NODES, NODE_FEATURES, HIDDEN_DIM, LATENT_DIM
    f32 = jnp.float32

    xin = xin_ref[0]                           # (N, 64) = [x | 0-pad | eps]
    x_pad = xin[:, :XPAD]                      # (N, 32), cols F..31 are zero
    eps = xin[:, XPAD:]                        # (N, 32)
    ei = ei_ref[0]                             # (2, E) int32
    E = ei.shape[1]

    V = vecs_ref[...]                          # (24, 128)

    def vrow(r, width):
        return V[r:r + 1, :width]              # (1, width)

    # static views into the packed weight slabs (zero row/lane padding is inert)
    wlr1 = wbig_ref[0:XPAD, :]                 # (32, 2H) GAT1 [lin_l | lin_r]
    wlr2 = wbig_ref[32:96, :]                  # (64, 2H) GAT2 [lin_l | lin_r]
    wng = wbig_ref[96:160, :]                  # (64, 4L) [n_mu|n_lv|g_mu|g_lv]
    ewab = wbig_ref[160:192, :]                # (32, 2H) edge [W_zi | W_zj]
    dw1 = wmed_ref[0:32, :]                    # (L, H)   decoder lin1
    dw2 = wmed_ref[32:96, :]                   # (H, H)   decoder lin2
    rwab = wmed_ref[96:192, :]                 # (96, H)  [rwa(27); 0(5); rwb(64)]
    dw3 = wout_ref[0:64, :]                    # (H, F)   decoder lin3
    rw2 = wout_ref[64:128, :]                  # (H, F)   refinement lin2

    # ---- dense adjacency adj[tgt, src] (+ self loops), built on the MXU ----
    rid = jax.lax.broadcasted_iota(jnp.int32, (N, E), 0)
    oh_dst = (rid == ei[1:2, :]).astype(f32)
    oh_src = (rid == ei[0:1, :]).astype(f32)
    adj = jax.lax.dot_general(oh_dst, oh_src, (((1,), (1,)), ((), ())),
                              preferred_element_type=f32)
    eye = (jax.lax.broadcasted_iota(jnp.int32, (N, N), 0)
           == jax.lax.broadcasted_iota(jnp.int32, (N, N), 1)).astype(f32)
    mask = (adj + eye) > 0.0

    def gatv2(h_in, wlr, blr, att_row, bias_out):
        """GATv2Conv, heads=1, concat=True, negative_slope=0.2, self-loops."""
        xlr = jnp.dot(h_in, wlr, preferred_element_type=f32) + blr
        xl = xlr[:, :H]                        # source transform
        xr = xlr[:, H:]                        # target transform
        s = xr[:, None, :] + xl[None, :, :]    # (N_tgt, N_src, H)
        s = jnp.where(s > 0, s, 0.2 * s)       # leaky_relu(0.2)
        # Lane reduce gives the (N, N) score tile directly; the MXU alternative
        # produces a (N*N, 1) column needing a sublane->lane relayout.
        e = jnp.sum(s * att_row, axis=-1)      # (N, N)
        e = jnp.where(mask, e, -1e30)
        e = e - jnp.max(e, axis=1, keepdims=True)
        p = jnp.where(mask, jnp.exp(e), 0.0)
        inv = pl.reciprocal(jnp.sum(p, axis=1, keepdims=True), approx=True)
        alpha = p * inv                        # masked softmax over sources
        return jnp.dot(alpha, xl, preferred_element_type=f32) + bias_out

    # --------------------------------- encoder ---------------------------------
    h = jnp.maximum(
        gatv2(x_pad, wlr1, vrow(R_BLR1, 2 * H), vrow(R_ATT1, H), vrow(R_BO1, H)), 0.0)
    h = jnp.maximum(
        gatv2(h, wlr2, vrow(R_BLR2, 2 * H), vrow(R_ATT2, H), vrow(R_BO2, H)), 0.0)

    # fused [node_mu | node_logvar | graph_mu | graph_logvar] head on [h ; mean(h)]
    graph_h = jnp.mean(h, axis=0, keepdims=True)                 # (1, H)
    stats = jnp.dot(jnp.concatenate([h, graph_h], axis=0), wng,
                    preferred_element_type=f32) + vrow(R_BNG, 4 * L)   # (N+1, 128)
    nstats = stats[:N, :2 * L]                                   # (N, 2L)
    gstats = stats[N:, 2 * L:]                                   # (1, 2L)
    node_mu = nstats[:, :L]
    node_logvar = nstats[:, L:]

    # reparameterize (training mode): z = mu + eps * exp(0.5 * logvar)
    z = node_mu + eps * jnp.exp(0.5 * node_logvar)               # (N, L)
    # TODO(synk): z_graph is reparameterized in the reference forward but never
    # consumed by decode(), so it is not materialized here (mu/logvar are output).

    # --------------------- decoder: node features + refinement -----------------
    a = jnp.maximum(jnp.dot(z, dw1, preferred_element_type=f32) + vrow(R_DB1, H), 0.0)
    a = _layernorm(a, vrow(R_DG1, H), vrow(R_DBE1, H))
    a = jnp.maximum(jnp.dot(a, dw2, preferred_element_type=f32) + vrow(R_DB2, H), 0.0)
    a = _layernorm(a, vrow(R_DG2, H), vrow(R_DBE2, H))
    nf = jnp.dot(a, dw3, preferred_element_type=f32) + vrow(R_DB3, F)      # (N, F)

    # fused feature_refinement: [nf | 0-pad | h] @ [rwa ; 0 ; rwb]
    cat = jnp.concatenate([nf, jnp.zeros((N, XPAD - F), f32), h], axis=1)  # (N, 96)
    r = jnp.maximum(jnp.dot(cat, rwab, preferred_element_type=f32) + vrow(R_RB1, H), 0.0)
    r = _layernorm(r, vrow(R_RG1, H), vrow(R_RBE1, H))
    nf_out = jnp.dot(r, rw2, preferred_element_type=f32) + vrow(R_RB2, F)  # (N, F)

    # --------------------- decoder: all-pairs edge logits ----------------------
    pab = jnp.dot(z, ewab, preferred_element_type=f32)           # (N, 2H)
    pa = pab[:, :H]                                              # contribution of z_i
    pb = pab[:, H:]                                              # contribution of z_j
    pre = pa[:, None, :] + pb[None, :, :] + vrow(R_EB1, H)       # (N, N, H)
    ae = _layernorm(jnp.maximum(pre, 0.0), vrow(R_EG, H), vrow(R_EBE, H))
    edge_mat = jnp.sum(ae * vrow(R_EW2, H), axis=-1) + vrow(R_EB2, 1)      # (N, N)

    # ----------------- pack all results into one lane-dense tile ----------------
    nf_pad = jnp.concatenate([nf_out, jnp.zeros((N, 32 - F), f32)], axis=1)    # (8, 32)
    edge_pad = jnp.concatenate([edge_mat, jnp.zeros((N, 32 - N), f32)], axis=1)  # (8, 32)
    top = jnp.concatenate([nstats, nf_pad, edge_pad], axis=1)                  # (8, 128)
    bot = jnp.concatenate([gstats, jnp.zeros((1, 128 - 2 * L), f32)], axis=1)  # (1, 128)
    bot = jnp.concatenate([bot, jnp.zeros((OUT_ROWS - N - 1, 128), f32)], axis=0)
    out_ref[0] = jnp.concatenate([top, bot], axis=0)                           # (16, 128)


# ------------------------------ packed parameters -----------------------------

def init_packed_params(key):
    F, H, L = NODE_FEATURES, HIDDEN_DIM, LATENT_DIM
    f32 = jnp.float32
    keys = iter(jax.random.split(key, 64))

    def w(*shape, scale=0.1):
        return jax.random.normal(next(keys), shape, f32) * scale

    def b(d):
        return w(1, d, scale=0.05)

    ones = lambda d: jnp.ones((1, d), f32)
    zeros = lambda d: jnp.zeros((1, d), f32)

    # --- wbig (192, 128): 128-lane-wide weight matrices, 8-aligned row blocks ---
    wbig = jnp.zeros((192, 128), f32)
    wbig = wbig.at[0:F, :].set(jnp.concatenate([w(F, H), w(F, H)], axis=1))      # GAT1 [l|r]
    wbig = wbig.at[32:96, :].set(jnp.concatenate([w(H, H), w(H, H)], axis=1))    # GAT2 [l|r]
    wbig = wbig.at[96:160, :].set(
        jnp.concatenate([w(H, L), w(H, L), w(H, L), w(H, L)], axis=1))           # stats heads
    wbig = wbig.at[160:192, :].set(jnp.concatenate([w(L, H), w(L, H)], axis=1))  # edge [zi|zj]

    # --- wmed (192, 64): 64-lane-wide weight matrices ---
    wmed = jnp.zeros((192, 64), f32)
    wmed = wmed.at[0:32, :].set(w(L, H))          # decoder lin1
    wmed = wmed.at[32:96, :].set(w(H, H))         # decoder lin2
    wmed = wmed.at[96:96 + F, :].set(w(F, H))     # refinement (node-feature part)
    wmed = wmed.at[128:192, :].set(w(H, H))       # refinement (embedding part)

    # --- wout (128, 27): 27-lane output projections ---
    wout = jnp.concatenate([w(H, F), w(H, F)], axis=0)   # decoder lin3 ; refinement lin2

    # --- vecs (24, 128): biases, LayerNorm gamma/beta, attention/edge rows ---
    def row(v):
        return jnp.concatenate([v, jnp.zeros((1, 128 - v.shape[1]), f32)], axis=1)

    rows = [None] * VEC_ROWS
    rows[R_BLR1] = row(jnp.concatenate([b(H), b(H)], axis=1))
    rows[R_BO1] = row(b(H))
    rows[R_BLR2] = row(jnp.concatenate([b(H), b(H)], axis=1))
    rows[R_BO2] = row(b(H))
    rows[R_BNG] = row(jnp.concatenate([b(L), b(L), b(L), b(L)], axis=1))
    rows[R_DB1] = row(b(H)); rows[R_DG1] = row(ones(H)); rows[R_DBE1] = row(zeros(H))
    rows[R_DB2] = row(b(H)); rows[R_DG2] = row(ones(H)); rows[R_DBE2] = row(zeros(H))
    rows[R_DB3] = row(b(F))
    rows[R_RB1] = row(b(H)); rows[R_RG1] = row(ones(H)); rows[R_RBE1] = row(zeros(H))
    rows[R_RB2] = row(b(F))
    rows[R_EB1] = row(b(H)); rows[R_EG] = row(ones(H)); rows[R_EBE] = row(zeros(H))
    rows[R_EB2] = row(b(1))
    rows[R_ATT1] = row(w(1, H))
    rows[R_ATT2] = row(w(1, H))
    rows[R_EW2] = row(w(1, H))
    for i in range(VEC_ROWS):
        if rows[i] is None:
            rows[i] = jnp.zeros((1, 128), f32)
    vecs = jnp.concatenate(rows, axis=0)

    return dict(wbig=wbig, wmed=wmed, wout=wout, vecs=vecs)


# --------------------------------- wrapper ------------------------------------

@jax.jit
def molecular_gvae_forward(x, edge_index, eps_nodes, slabs):
    """Batched forward: each graph b is processed independently (one grid step)."""
    B, N, F = x.shape
    L = LATENT_DIM
    E = edge_index.shape[-1]

    # per-graph activation slab: [x | 0-pad | eps]  -> (B, N, 64)
    xin = jnp.concatenate(
        [x, jnp.zeros((B, N, XPAD - F), jnp.float32), eps_nodes], axis=-1)

    out = pl.pallas_call(
        fused_gvae_kernel,
        out_shape=jax.ShapeDtypeStruct((B, OUT_ROWS, 128), jnp.float32),
        grid=(B,),
        in_specs=[
            pl.BlockSpec((1, N, XPAD + L), lambda b: (b, 0, 0)),
            pl.BlockSpec((1, 2, E), lambda b: (b, 0, 0)),
            pl.BlockSpec(slabs['wbig'].shape, lambda b: (0, 0)),   # VMEM-resident
            pl.BlockSpec(slabs['wmed'].shape, lambda b: (0, 0)),
            pl.BlockSpec(slabs['wout'].shape, lambda b: (0, 0)),
            pl.BlockSpec(slabs['vecs'].shape, lambda b: (0, 0)),
        ],
        out_specs=pl.BlockSpec((1, OUT_ROWS, 128), lambda b: (b, 0, 0)),
        compiler_params=pltpu.CompilerParams(
            dimension_semantics=("parallel",)),
        cost_estimate=pl.CostEstimate(
            flops=705_000 * B,
            transcendentals=700 * B,
            bytes_accessed=190_000 + 11_000 * B),
    )(xin, edge_index, slabs['wbig'], slabs['wmed'], slabs['wout'], slabs['vecs'])

    # unpack the lane-dense output tile
    nstats = out[:, :N, 0:2 * L]
    node_mu = nstats[..., :L]
    node_logvar = nstats[..., L:]
    node_features = out[:, :N, 2 * L:2 * L + F]
    edge_mat = out[:, :N, 96:96 + N]
    gstats = out[:, N, 0:2 * L]
    graph_mu = gstats[..., :L]
    graph_logvar = gstats[..., L:]

    # same (i, j > i) order as the PyTorch double loop
    iu, ju = jnp.triu_indices(N, k=1)
    edge_logits = edge_mat[:, iu, ju]

    return (node_features, edge_logits, node_mu, node_logvar, graph_mu, graph_logvar)


# ----------------------------------- main -------------------------------------

if __name__ == "__main__":
    key = jax.random.PRNGKey(0)
    k_x, k_eps, k_p = jax.random.split(key, 3)

    B, N = 4, N_NODES
    x = jax.random.normal(k_x, (B, N, NODE_FEATURES), jnp.float32)

    # undirected ring graph, both directions (row 0 = source, row 1 = target)
    idx = jnp.arange(N)
    src = jnp.concatenate([idx, (idx + 1) % N])
    dst = jnp.concatenate([(idx + 1) % N, idx])
    ei1 = jnp.stack([src, dst]).astype(jnp.int32)            # (2, 2N)
    edge_index = jnp.tile(ei1[None], (B, 1, 1))               # (B, 2, 2N)

    # TODO(synk): torch.randn reparameterization noise is replaced by a
    # deterministic JAX PRNG draw supplied from the host (same math, different bits).
    eps_nodes = jax.random.normal(k_eps, (B, N, LATENT_DIM), jnp.float32)

    slabs = init_packed_params(k_p)
    outs = molecular_gvae_forward(x, edge_index, eps_nodes, slabs)
    outs = jax.block_until_ready(outs)

    node_features, edge_logits, node_mu, node_logvar, graph_mu, graph_logvar = outs
    assert node_features.shape == (B, N, NODE_FEATURES)
    assert edge_logits.shape == (B, N * (N - 1) // 2)
    assert node_mu.shape == (B, N, LATENT_DIM)
    assert node_logvar.shape == (B, N, LATENT_DIM)
    assert graph_mu.shape == (B, LATENT_DIM)
    assert graph_logvar.shape == (B, LATENT_DIM)
    assert all(bool(jnp.all(jnp.isfinite(o))) for o in outs)

    print("KERNEL_OK")
</pallas_src>

<mosaic_0001>
module attributes {stable_mosaic.version = 11 : i64} {
  func.func private @main(%arg0: i32) attributes {dimension_semantics = [#tpu.dimension_semantics<core_parallel>], iteration_bounds = array<i64: 2>, tpu.core_type = #tpu.core_type<sc_scalar_subcore>, window_params = []} {
    return
  }
}

module attributes {stable_mosaic.version = 11 : i64} {
  func.func private @main(%arg0: i32) attributes {dimension_semantics = [#tpu.dimension_semantics<core_parallel>], iteration_bounds = array<i64: 2>, tpu.core_type = #tpu.core_type<sc_scalar_subcore>, window_params = []} {
    return
  }
}

module attributes {stable_mosaic.version = 11 : i64} {
  func.func @fused_gvae_kernel(%arg0: i32, %arg1: memref<1x8x64xf32, #tpu.memory_space<vmem>>, %arg2: memref<1x2x16xi32, #tpu.memory_space<vmem>>, %arg3: memref<192x128xf32, #tpu.memory_space<vmem>>, %arg4: memref<192x64xf32, #tpu.memory_space<vmem>>, %arg5: memref<128x27xf32, #tpu.memory_space<vmem>>, %arg6: memref<24x128xf32, #tpu.memory_space<vmem>>, %arg7: memref<1x16x128xf32, #tpu.memory_space<vmem>>) attributes {dimension_semantics = [#tpu.dimension_semantics<parallel>], iteration_bounds = array<i64: 4>, scalar_prefetch = 0 : i64, scratch_operands = 0 : i64, tpu.core_type = #tpu.core_type<tc>, window_params = [{transform_indices = @transform_0, window_bounds = array<i64: 1, 8, 64>}, {transform_indices = @transform_1, window_bounds = array<i64: 1, 2, 16>}, {pipeline_mode = #tpu.pipeline_mode<synchronous>, transform_indices = @transform_2, window_bounds = array<i64: 192, 128>}, {pipeline_mode = #tpu.pipeline_mode<synchronous>, transform_indices = @transform_3, window_bounds = array<i64: 192, 64>}, {pipeline_mode = #tpu.pipeline_mode<synchronous>, transform_indices = @transform_4, window_bounds = array<i64: 128, 27>}, {pipeline_mode = #tpu.pipeline_mode<synchronous>, transform_indices = @transform_5, window_bounds = array<i64: 24, 128>}, {transform_indices = @transform_6, window_bounds = array<i64: 1, 16, 128>}]} {
    %c0 = arith.constant 0 : index
    %c0_0 = arith.constant 0 : index
    %c0_1 = arith.constant 0 : index
    %0 = vector.load %arg1[%c0, %c0_0, %c0_1] : memref<1x8x64xf32, #tpu.memory_space<vmem>>, vector<1x8x64xf32>
    %1 = vector.shape_cast %0 : vector<1x8x64xf32> to vector<8x64xf32>
    %2 = vector.extract_strided_slice %1 {offsets = [0, 0], sizes = [8, 32], strides = [1, 1]} : vector<8x64xf32> to vector<8x32xf32>
    %3 = vector.extract_strided_slice %1 {offsets = [0, 32], sizes = [8, 32], strides = [1, 1]} : vector<8x64xf32> to vector<8x32xf32>
    %c0_2 = arith.constant 0 : index
    %c0_3 = arith.constant 0 : index
    %c0_4 = arith.constant 0 : index
    %4 = vector.load %arg2[%c0_2, %c0_3, %c0_4] : memref<1x2x16xi32, #tpu.memory_space<vmem>>, vector<1x2x16xi32>
    %5 = vector.shape_cast %4 : vector<1x2x16xi32> to vector<2x16xi32>
    %c0_5 = arith.constant 0 : index
    %c0_6 = arith.constant 0 : index
    %6 = vector.load %arg6[%c0_5, %c0_6] : memref<24x128xf32, #tpu.memory_space<vmem>>, vector<24x128xf32>
    %c0_7 = arith.constant 0 : index
    %c0_8 = arith.constant 0 : index
    %7 = vector.load %arg3[%c0_7, %c0_8] : memref<192x128xf32, #tpu.memory_space<vmem>>, vector<32x128xf32>
    %c32 = arith.constant 32 : index
    %c0_9 = arith.constant 0 : index
    %8 = vector.load %arg3[%c32, %c0_9] : memref<192x128xf32, #tpu.memory_space<vmem>>, vector<64x128xf32>
    %c96 = arith.constant 96 : index
    %c0_10 = arith.constant 0 : index
    %9 = vector.load %arg3[%c96, %c0_10] : memref<192x128xf32, #tpu.memory_space<vmem>>, vector<64x128xf32>
    %c160 = arith.constant 160 : index
    %c0_11 = arith.constant 0 : index
    %10 = vector.load %arg3[%c160, %c0_11] : memref<192x128xf32, #tpu.memory_space<vmem>>, vector<32x128xf32>
    %c0_12 = arith.constant 0 : index
    %c0_13 = arith.constant 0 : index
    %11 = vector.load %arg4[%c0_12, %c0_13] : memref<192x64xf32, #tpu.memory_space<vmem>>, vector<32x64xf32>
    %c32_14 = arith.constant 32 : index
    %c0_15 = arith.constant 0 : index
    %12 = vector.load %arg4[%c32_14, %c0_15] : memref<192x64xf32, #tpu.memory_space<vmem>>, vector<64x64xf32>
    %c96_16 = arith.constant 96 : index
    %c0_17 = arith.constant 0 : index
    %13 = vector.load %arg4[%c96_16, %c0_17] : memref<192x64xf32, #tpu.memory_space<vmem>>, vector<96x64xf32>
    %c0_18 = arith.constant 0 : index
    %c0_19 = arith.constant 0 : index
    %14 = vector.load %arg5[%c0_18, %c0_19] : memref<128x27xf32, #tpu.memory_space<vmem>>, vector<64x27xf32>
    %c64 = arith.constant 64 : index
    %c0_20 = arith.constant 0 : index
    %15 = vector.load %arg5[%c64, %c0_20] : memref<128x27xf32, #tpu.memory_space<vmem>>, vector<64x27xf32>
    %16 = tpu.iota {dimensions = array<i32: 0>} : vector<8x16xi32>
    %17 = vector.extract_strided_slice %5 {offsets = [1, 0], sizes = [1, 16], strides = [1, 1]} : vector<2x16xi32> to vector<1x16xi32>
    %18 = vector.broadcast %17 : vector<1x16xi32> to vector<8x16xi32>
    %19 = arith.cmpi eq, %16, %18 : vector<8x16xi32>
    %20 = arith.extui %19 : vector<8x16xi1> to vector<8x16xi32>
    %21 = arith.sitofp %20 : vector<8x16xi32> to vector<8x16xf32>
    %22 = vector.extract_strided_slice %5 {offsets = [0, 0], sizes = [1, 16], strides = [1, 1]} : vector<2x16xi32> to vector<1x16xi32>
    %23 = vector.broadcast %22 : vector<1x16xi32> to vector<8x16xi32>
    %24 = arith.cmpi eq, %16, %23 : vector<8x16xi32>
    %25 = arith.extui %24 : vector<8x16xi1> to vector<8x16xi32>
    %26 = arith.sitofp %25 : vector<8x16xi32> to vector<8x16xf32>
    %cst = arith.constant dense<0.000000e+00> : vector<8x8xf32>
    %27 = tpu.matmul %21, %26, %cst {dimension_numbers = #tpu.dot_dimension_numbers<[1], [1], [0], [0], [0, 0, 1, 0], [], []>} : vector<8x16xf32>, vector<8x16xf32>, vector<8x8xf32> -> vector<8x8xf32>
    %28 = tpu.iota {dimensions = array<i32: 0>} : vector<8x8xi32>
    %29 = tpu.iota {dimensions = array<i32: 1>} : vector<8x8xi32>
    %30 = arith.cmpi eq, %28, %29 : vector<8x8xi32>
    %31 = arith.extui %30 : vector<8x8xi1> to vector<8x8xi32>
    %32 = arith.sitofp %31 : vector<8x8xi32> to vector<8x8xf32>
    %33 = arith.addf %27, %32 : vector<8x8xf32>
    %cst_21 = arith.constant 0.000000e+00 : f32
    %34 = vector.broadcast %cst_21 : f32 to vector<8x8xf32>
    %35 = arith.cmpf ogt, %33, %34 : vector<8x8xf32>
    %36 = vector.extract_strided_slice %6 {offsets = [0, 0], sizes = [1, 128], strides = [1, 1]} : vector<24x128xf32> to vector<1x128xf32>
    %37 = vector.extract_strided_slice %6 {offsets = [20, 0], sizes = [1, 64], strides = [1, 1]} : vector<24x128xf32> to vector<1x64xf32>
    %38 = vector.extract_strided_slice %6 {offsets = [1, 0], sizes = [1, 64], strides = [1, 1]} : vector<24x128xf32> to vector<1x64xf32>
    %cst_22 = arith.constant dense<0.000000e+00> : vector<8x128xf32>
    %39 = tpu.matmul %2, %7, %cst_22 {dimension_numbers = #tpu.dot_dimension_numbers<[1], [0], [0], [1], [0, 0, 1, 1], [], []>} : vector<8x32xf32>, vector<32x128xf32>, vector<8x128xf32> -> vector<8x128xf32>
    %40 = vector.broadcast %36 : vector<1x128xf32> to vector<8x128xf32>
    %41 = arith.addf %39, %40 : vector<8x128xf32>
    %42 = vector.extract_strided_slice %41 {offsets = [0, 0], sizes = [8, 64], strides = [1, 1]} : vector<8x128xf32> to vector<8x64xf32>
    %43 = vector.extract_strided_slice %41 {offsets = [0, 64], sizes = [8, 64], strides = [1, 1]} : vector<8x128xf32> to vector<8x64xf32>
    %44 = vector.shape_cast %43 : vector<8x64xf32> to vector<8x1x64xf32>
    %45 = vector.shape_cast %42 : vector<8x64xf32> to vector<1x8x64xf32>
    %46 = vector.broadcast %44 : vector<8x1x64xf32> to vector<8x8x64xf32>
    %47 = vector.broadcast %45 : vector<1x8x64xf32> to vector<8x8x64xf32>
    %48 = arith.addf %46, %47 : vector<8x8x64xf32>
    %cst_23 = arith.constant 0.000000e+00 : f32
    %49 = vector.broadcast %cst_23 : f32 to vector<8x8x64xf32>
    %50 = arith.cmpf ogt, %48, %49 : vector<8x8x64xf32>
    %cst_24 = arith.constant 2.000000e-01 : f32
    %51 = vector.broadcast %cst_24 : f32 to vector<8x8x64xf32>
    %52 = arith.mulf %51, %48 : vector<8x8x64xf32>
    %53 = arith.select %50, %48, %52 : vector<8x8x64xi1>, vector<8x8x64xf32>
    %54 = vector.shape_cast %37 : vector<1x64xf32> to vector<1x1x64xf32>
    %55 = vector.broadcast %54 : vector<1x1x64xf32> to vector<8x8x64xf32>
    %56 = arith.mulf %53, %55 : vector<8x8x64xf32>
    %cst_25 = arith.constant dense<0.000000e+00> : vector<8x8xf32>
    %57 = vector.multi_reduction <add>, %56, %cst_25 [2] : vector<8x8x64xf32> to vector<8x8xf32>
    %cst_26 = arith.constant -1.000000e+30 : f32
    %58 = vector.broadcast %cst_26 : f32 to vector<8x8xf32>
    %59 = arith.select %35, %57, %58 : vector<8x8xi1>, vector<8x8xf32>
    %cst_27 = arith.constant dense<0xFF800000> : vector<8xf32>
    %60 = vector.multi_reduction <maximumf>, %59, %cst_27 [1] : vector<8x8xf32> to vector<8xf32>
    %61 = vector.shape_cast %60 : vector<8xf32> to vector<8x1xf32>
    %62 = vector.broadcast %61 : vector<8x1xf32> to vector<8x8xf32>
    %63 = arith.subf %59, %62 : vector<8x8xf32>
    %64 = math.exp %63 : vector<8x8xf32>
    %cst_28 = arith.constant 0.000000e+00 : f32
    %65 = vector.broadcast %cst_28 : f32 to vector<8x8xf32>
    %66 = arith.select %35, %64, %65 : vector<8x8xi1>, vector<8x8xf32>
    %cst_29 = arith.constant dense<0.000000e+00> : vector<8xf32>
    %67 = vector.multi_reduction <add>, %66, %cst_29 [1] : vector<8x8xf32> to vector<8xf32>
    %68 = vector.shape_cast %67 : vector<8xf32> to vector<8x1xf32>
    %69 = tpu.reciprocal %68 {approx = true} : vector<8x1xf32> -> vector<8x1xf32>
    %70 = vector.broadcast %69 : vector<8x1xf32> to vector<8x8xf32>
    %71 = arith.mulf %66, %70 : vector<8x8xf32>
    %cst_30 = arith.constant dense<0.000000e+00> : vector<8x64xf32>
    %72 = tpu.matmul %71, %42, %cst_30 {dimension_numbers = #tpu.dot_dimension_numbers<[1], [0], [0], [1], [0, 0, 1, 1], [], []>} : vector<8x8xf32>, vector<8x64xf32>, vector<8x64xf32> -> vector<8x64xf32>
    %73 = vector.broadcast %38 : vector<1x64xf32> to vector<8x64xf32>
    %74 = arith.addf %72, %73 : vector<8x64xf32>
    %cst_31 = arith.constant 0.000000e+00 : f32
    %75 = vector.broadcast %cst_31 : f32 to vector<8x64xf32>
    %76 = arith.maximumf %74, %75 : vector<8x64xf32>
    %77 = vector.extract_strided_slice %6 {offsets = [2, 0], sizes = [1, 128], strides = [1, 1]} : vector<24x128xf32> to vector<1x128xf32>
    %78 = vector.extract_strided_slice %6 {offsets = [21, 0], sizes = [1, 64], strides = [1, 1]} : vector<24x128xf32> to vector<1x64xf32>
    %79 = vector.extract_strided_slice %6 {offsets = [3, 0], sizes = [1, 64], strides = [1, 1]} : vector<24x128xf32> to vector<1x64xf32>
    %cst_32 = arith.constant dense<0.000000e+00> : vector<8x128xf32>
    %80 = tpu.matmul %76, %8, %cst_32 {dimension_numbers = #tpu.dot_dimension_numbers<[1], [0], [0], [1], [0, 0, 1, 1], [], []>} : vector<8x64xf32>, vector<64x128xf32>, vector<8x128xf32> -> vector<8x128xf32>
    %81 = vector.broadcast %77 : vector<1x128xf32> to vector<8x128xf32>
    %82 = arith.addf %80, %81 : vector<8x128xf32>
    %83 = vector.extract_strided_slice %82 {offsets = [0, 0], sizes = [8, 64], strides = [1, 1]} : vector<8x128xf32> to vector<8x64xf32>
    %84 = vector.extract_strided_slice %82 {offsets = [0, 64], sizes = [8, 64], strides = [1, 1]} : vector<8x128xf32> to vector<8x64xf32>
    %85 = vector.shape_cast %84 : vector<8x64xf32> to vector<8x1x64xf32>
    %86 = vector.shape_cast %83 : vector<8x64xf32> to vector<1x8x64xf32>
    %87 = vector.broadcast %85 : vector<8x1x64xf32> to vector<8x8x64xf32>
    %88 = vector.broadcast %86 : vector<1x8x64xf32> to vector<8x8x64xf32>
    %89 = arith.addf %87, %88 : vector<8x8x64xf32>
    %cst_33 = arith.constant 0.000000e+00 : f32
    %90 = vector.broadcast %cst_33 : f32 to vector<8x8x64xf32>
    %91 = arith.cmpf ogt, %89, %90 : vector<8x8x64xf32>
    %cst_34 = arith.constant 2.000000e-01 : f32
    %92 = vector.broadcast %cst_34 : f32 to vector<8x8x64xf32>
    %93 = arith.mulf %92, %89 : vector<8x8x64xf32>
    %94 = arith.select %91, %89, %93 : vector<8x8x64xi1>, vector<8x8x64xf32>
    %95 = vector.shape_cast %78 : vector<1x64xf32> to vector<1x1x64xf32>
    %96 = vector.broadcast %95 : vector<1x1x64xf32> to vector<8x8x64xf32>
    %97 = arith.mulf %94, %96 : vector<8x8x64xf32>
    %cst_35 = arith.constant dense<0.000000e+00> : vector<8x8xf32>
    %98 = vector.multi_reduction <add>, %97, %cst_35 [2] : vector<8x8x64xf32> to vector<8x8xf32>
    %cst_36 = arith.constant -1.000000e+30 : f32
    %99 = vector.broadcast %cst_36 : f32 to vector<8x8xf32>
    %100 = arith.select %35, %98, %99 : vector<8x8xi1>, vector<8x8xf32>
    %cst_37 = arith.constant dense<0xFF800000> : vector<8xf32>
    %101 = vector.multi_reduction <maximumf>, %100, %cst_37 [1] : vector<8x8xf32> to vector<8xf32>
    %102 = vector.shape_cast %101 : vector<8xf32> to vector<8x1xf32>
    %103 = vector.broadcast %102 : vector<8x1xf32> to vector<8x8xf32>
    %104 = arith.subf %100, %103 : vector<8x8xf32>
    %105 = math.exp %104 : vector<8x8xf32>
    %cst_38 = arith.constant 0.000000e+00 : f32
    %106 = vector.broadcast %cst_38 : f32 to vector<8x8xf32>
    %107 = arith.select %35, %105, %106 : vector<8x8xi1>, vector<8x8xf32>
    %cst_39 = arith.constant dense<0.000000e+00> : vector<8xf32>
    %108 = vector.multi_reduction <add>, %107, %cst_39 [1] : vector<8x8xf32> to vector<8xf32>
    %109 = vector.shape_cast %108 : vector<8xf32> to vector<8x1xf32>
    %110 = tpu.reciprocal %109 {approx = true} : vector<8x1xf32> -> vector<8x1xf32>
    %111 = vector.broadcast %110 : vector<8x1xf32> to vector<8x8xf32>
    %112 = arith.mulf %107, %111 : vector<8x8xf32>
    %cst_40 = arith.constant dense<0.000000e+00> : vector<8x64xf32>
    %113 = tpu.matmul %112, %83, %cst_40 {dimension_numbers = #tpu.dot_dimension_numbers<[1], [0], [0], [1], [0, 0, 1, 1], [], []>} : vector<8x8xf32>, vector<8x64xf32>, vector<8x64xf32> -> vector<8x64xf32>
    %114 = vector.broadcast %79 : vector<1x64xf32> to vector<8x64xf32>
    %115 = arith.addf %113, %114 : vector<8x64xf32>
    %cst_41 = arith.constant 0.000000e+00 : f32
    %116 = vector.broadcast %cst_41 : f32 to vector<8x64xf32>
    %117 = arith.maximumf %115, %116 : vector<8x64xf32>
    %cst_42 = arith.constant dense<0.000000e+00> : vector<64xf32>
    %118 = vector.multi_reduction <add>, %117, %cst_42 [0] : vector<8x64xf32> to vector<64xf32>
    %119 = vector.shape_cast %118 : vector<64xf32> to vector<1x64xf32>
    %cst_43 = arith.constant 8.000000e+00 : f32
    %120 = vector.broadcast %cst_43 : f32 to vector<1x64xf32>
    %121 = arith.divf %119, %120 : vector<1x64xf32>
    %122 = tpu.concatenate %117, %121 in 0 : vector<8x64xf32>, vector<1x64xf32> -> vector<9x64xf32>
    %cst_44 = arith.constant dense<0.000000e+00> : vector<9x128xf32>
    %123 = tpu.matmul %122, %9, %cst_44 {dimension_numbers = #tpu.dot_dimension_numbers<[1], [0], [0], [1], [0, 0, 1, 1], [], []>} : vector<9x64xf32>, vector<64x128xf32>, vector<9x128xf32> -> vector<9x128xf32>
    %124 = vector.extract_strided_slice %6 {offsets = [4, 0], sizes = [1, 128], strides = [1, 1]} : vector<24x128xf32> to vector<1x128xf32>
    %125 = vector.broadcast %124 : vector<1x128xf32> to vector<9x128xf32>
    %126 = arith.addf %123, %125 : vector<9x128xf32>
    %127 = vector.extract_strided_slice %126 {offsets = [0, 0], sizes = [8, 64], strides = [1, 1]} : vector<9x128xf32> to vector<8x64xf32>
    %128 = vector.extract_strided_slice %126 {offsets = [8, 64], sizes = [1, 64], strides = [1, 1]} : vector<9x128xf32> to vector<1x64xf32>
    %129 = vector.extract_strided_slice %127 {offsets = [0, 0], sizes = [8, 32], strides = [1, 1]} : vector<8x64xf32> to vector<8x32xf32>
    %130 = vector.extract_strided_slice %127 {offsets = [0, 32], sizes = [8, 32], strides = [1, 1]} : vector<8x64xf32> to vector<8x32xf32>
    %cst_45 = arith.constant 5.000000e-01 : f32
    %131 = vector.broadcast %cst_45 : f32 to vector<8x32xf32>
    %132 = arith.mulf %131, %130 : vector<8x32xf32>
    %133 = math.exp %132 : vector<8x32xf32>
    %134 = arith.mulf %3, %133 : vector<8x32xf32>
    %135 = arith.addf %129, %134 : vector<8x32xf32>
    %cst_46 = arith.constant dense<0.000000e+00> : vector<8x64xf32>
    %136 = tpu.matmul %135, %11, %cst_46 {dimension_numbers = #tpu.dot_dimension_numbers<[1], [0], [0], [1], [0, 0, 1, 1], [], []>} : vector<8x32xf32>, vector<32x64xf32>, vector<8x64xf32> -> vector<8x64xf32>
    %137 = vector.extract_strided_slice %6 {offsets = [5, 0], sizes = [1, 64], strides = [1, 1]} : vector<24x128xf32> to vector<1x64xf32>
    %138 = vector.broadcast %137 : vector<1x64xf32> to vector<8x64xf32>
    %139 = arith.addf %136, %138 : vector<8x64xf32>
    %cst_47 = arith.constant 0.000000e+00 : f32
    %140 = vector.broadcast %cst_47 : f32 to vector<8x64xf32>
    %141 = arith.maximumf %139, %140 : vector<8x64xf32>
    %142 = vector.extract_strided_slice %6 {offsets = [6, 0], sizes = [1, 64], strides = [1, 1]} : vector<24x128xf32> to vector<1x64xf32>
    %143 = vector.extract_strided_slice %6 {offsets = [7, 0], sizes = [1, 64], strides = [1, 1]} : vector<24x128xf32> to vector<1x64xf32>
    %cst_48 = arith.constant dense<0.000000e+00> : vector<8xf32>
    %144 = vector.multi_reduction <add>, %141, %cst_48 [1] : vector<8x64xf32> to vector<8xf32>
    %145 = vector.shape_cast %144 : vector<8xf32> to vector<8x1xf32>
    %cst_49 = arith.constant 6.400000e+01 : f32
    %146 = vector.broadcast %cst_49 : f32 to vector<8x1xf32>
    %147 = arith.divf %145, %146 : vector<8x1xf32>
    %148 = vector.broadcast %147 : vector<8x1xf32> to vector<8x64xf32>
    %149 = arith.subf %141, %148 : vector<8x64xf32>
    %150 = arith.mulf %149, %149 : vector<8x64xf32>
    %cst_50 = arith.constant dense<0.000000e+00> : vector<8xf32>
    %151 = vector.multi_reduction <add>, %150, %cst_50 [1] : vector<8x64xf32> to vector<8xf32>
    %152 = vector.shape_cast %151 : vector<8xf32> to vector<8x1xf32>
    %cst_51 = arith.constant 6.400000e+01 : f32
    %153 = vector.broadcast %cst_51 : f32 to vector<8x1xf32>
    %154 = arith.divf %152, %153 : vector<8x1xf32>
    %155 = vector.broadcast %147 : vector<8x1xf32> to vector<8x64xf32>
    %156 = arith.subf %141, %155 : vector<8x64xf32>
    %cst_52 = arith.constant 9.99999974E-6 : f32
    %157 = vector.broadcast %cst_52 : f32 to vector<8x1xf32>
    %158 = arith.addf %154, %157 : vector<8x1xf32>
    %159 = math.rsqrt %158 : vector<8x1xf32>
    %160 = vector.broadcast %159 : vector<8x1xf32> to vector<8x64xf32>
    %161 = arith.mulf %156, %160 : vector<8x64xf32>
    %162 = vector.broadcast %142 : vector<1x64xf32> to vector<8x64xf32>
    %163 = arith.mulf %161, %162 : vector<8x64xf32>
    %164 = vector.broadcast %143 : vector<1x64xf32> to vector<8x64xf32>
    %165 = arith.addf %163, %164 : vector<8x64xf32>
    %cst_53 = arith.constant dense<0.000000e+00> : vector<8x64xf32>
    %166 = tpu.matmul %165, %12, %cst_53 {dimension_numbers = #tpu.dot_dimension_numbers<[1], [0], [0], [1], [0, 0, 1, 1], [], []>} : vector<8x64xf32>, vector<64x64xf32>, vector<8x64xf32> -> vector<8x64xf32>
    %167 = vector.extract_strided_slice %6 {offsets = [8, 0], sizes = [1, 64], strides = [1, 1]} : vector<24x128xf32> to vector<1x64xf32>
    %168 = vector.broadcast %167 : vector<1x64xf32> to vector<8x64xf32>
    %169 = arith.addf %166, %168 : vector<8x64xf32>
    %cst_54 = arith.constant 0.000000e+00 : f32
    %170 = vector.broadcast %cst_54 : f32 to vector<8x64xf32>
    %171 = arith.maximumf %169, %170 : vector<8x64xf32>
    %172 = vector.extract_strided_slice %6 {offsets = [9, 0], sizes = [1, 64], strides = [1, 1]} : vector<24x128xf32> to vector<1x64xf32>
    %173 = vector.extract_strided_slice %6 {offsets = [10, 0], sizes = [1, 64], strides = [1, 1]} : vector<24x128xf32> to vector<1x64xf32>
    %cst_55 = arith.constant dense<0.000000e+00> : vector<8xf32>
    %174 = vector.multi_reduction <add>, %171, %cst_55 [1] : vector<8x64xf32> to vector<8xf32>
    %175 = vector.shape_cast %174 : vector<8xf32> to vector<8x1xf32>
    %cst_56 = arith.constant 6.400000e+01 : f32
    %176 = vector.broadcast %cst_56 : f32 to vector<8x1xf32>
    %177 = arith.divf %175, %176 : vector<8x1xf32>
    %178 = vector.broadcast %177 : vector<8x1xf32> to vector<8x64xf32>
    %179 = arith.subf %171, %178 : vector<8x64xf32>
    %180 = arith.mulf %179, %179 : vector<8x64xf32>
    %cst_57 = arith.constant dense<0.000000e+00> : vector<8xf32>
    %181 = vector.multi_reduction <add>, %180, %cst_57 [1] : vector<8x64xf32> to vector<8xf32>
    %182 = vector.shape_cast %181 : vector<8xf32> to vector<8x1xf32>
    %cst_58 = arith.constant 6.400000e+01 : f32
    %183 = vector.broadcast %cst_58 : f32 to vector<8x1xf32>
    %184 = arith.divf %182, %183 : vector<8x1xf32>
    %185 = vector.broadcast %177 : vector<8x1xf32> to vector<8x64xf32>
    %186 = arith.subf %171, %185 : vector<8x64xf32>
    %cst_59 = arith.constant 9.99999974E-6 : f32
    %187 = vector.broadcast %cst_59 : f32 to vector<8x1xf32>
    %188 = arith.addf %184, %187 : vector<8x1xf32>
    %189 = math.rsqrt %188 : vector<8x1xf32>
    %190 = vector.broadcast %189 : vector<8x1xf32> to vector<8x64xf32>
    %191 = arith.mulf %186, %190 : vector<8x64xf32>
    %192 = vector.broadcast %172 : vector<1x64xf32> to vector<8x64xf32>
    %193 = arith.mulf %191, %192 : vector<8x64xf32>
    %194 = vector.broadcast %173 : vector<1x64xf32> to vector<8x64xf32>
    %195 = arith.addf %193, %194 : vector<8x64xf32>
    %cst_60 = arith.constant dense<0.000000e+00> : vector<8x27xf32>
    %196 = tpu.matmul %195, %14, %cst_60 {dimension_numbers = #tpu.dot_dimension_numbers<[1], [0], [0], [1], [0, 0, 1, 1], [], []>} : vector<8x64xf32>, vector<64x27xf32>, vector<8x27xf32> -> vector<8x27xf32>
    %197 = vector.extract_strided_slice %6 {offsets = [11, 0], sizes = [1, 27], strides = [1, 1]} : vector<24x128xf32> to vector<1x27xf32>
    %198 = vector.broadcast %197 : vector<1x27xf32> to vector<8x27xf32>
    %199 = arith.addf %196, %198 : vector<8x27xf32>
    %cst_61 = arith.constant 0.000000e+00 : f32
    %200 = vector.broadcast %cst_61 : f32 to vector<8x5xf32>
    %201 = tpu.concatenate %199, %200, %117 in 1 : vector<8x27xf32>, vector<8x5xf32>, vector<8x64xf32> -> vector<8x96xf32>
    %cst_62 = arith.constant dense<0.000000e+00> : vector<8x64xf32>
    %202 = tpu.matmul %201, %13, %cst_62 {dimension_numbers = #tpu.dot_dimension_numbers<[1], [0], [0], [1], [0, 0, 1, 1], [], []>} : vector<8x96xf32>, vector<96x64xf32>, vector<8x64xf32> -> vector<8x64xf32>
    %203 = vector.extract_strided_slice %6 {offsets = [12, 0], sizes = [1, 64], strides = [1, 1]} : vector<24x128xf32> to vector<1x64xf32>
    %204 = vector.broadcast %203 : vector<1x64xf32> to vector<8x64xf32>
    %205 = arith.addf %202, %204 : vector<8x64xf32>
    %cst_63 = arith.constant 0.000000e+00 : f32
    %206 = vector.broadcast %cst_63 : f32 to vector<8x64xf32>
    %207 = arith.maximumf %205, %206 : vector<8x64xf32>
    %208 = vector.extract_strided_slice %6 {offsets = [13, 0], sizes = [1, 64], strides = [1, 1]} : vector<24x128xf32> to vector<1x64xf32>
    %209 = vector.extract_strided_slice %6 {offsets = [14, 0], sizes = [1, 64], strides = [1, 1]} : vector<24x128xf32> to vector<1x64xf32>
    %cst_64 = arith.constant dense<0.000000e+00> : vector<8xf32>
    %210 = vector.multi_reduction <add>, %207, %cst_64 [1] : vector<8x64xf32> to vector<8xf32>
    %211 = vector.shape_cast %210 : vector<8xf32> to vector<8x1xf32>
    %cst_65 = arith.constant 6.400000e+01 : f32
    %212 = vector.broadcast %cst_65 : f32 to vector<8x1xf32>
    %213 = arith.divf %211, %212 : vector<8x1xf32>
    %214 = vector.broadcast %213 : vector<8x1xf32> to vector<8x64xf32>
    %215 = arith.subf %207, %214 : vector<8x64xf32>
    %216 = arith.mulf %215, %215 : vector<8x64xf32>
    %cst_66 = arith.constant dense<0.000000e+00> : vector<8xf32>
    %217 = vector.multi_reduction <add>, %216, %cst_66 [1] : vector<8x64xf32> to vector<8xf32>
    %218 = vector.shape_cast %217 : vector<8xf32> to vector<8x1xf32>
    %cst_67 = arith.constant 6.400000e+01 : f32
    %219 = vector.broadcast %cst_67 : f32 to vector<8x1xf32>
    %220 = arith.divf %218, %219 : vector<8x1xf32>
    %221 = vector.broadcast %213 : vector<8x1xf32> to vector<8x64xf32>
    %222 = arith.subf %207, %221 : vector<8x64xf32>
    %cst_68 = arith.constant 9.99999974E-6 : f32
    %223 = vector.broadcast %cst_68 : f32 to vector<8x1xf32>
    %224 = arith.addf %220, %223 : vector<8x1xf32>
    %225 = math.rsqrt %224 : vector<8x1xf32>
    %226 = vector.broadcast %225 : vector<8x1xf32> to vector<8x64xf32>
    %227 = arith.mulf %222, %226 : vector<8x64xf32>
    %228 = vector.broadcast %208 : vector<1x64xf32> to vector<8x64xf32>
    %229 = arith.mulf %227, %228 : vector<8x64xf32>
    %230 = vector.broadcast %209 : vector<1x64xf32> to vector<8x64xf32>
    %231 = arith.addf %229, %230 : vector<8x64xf32>
    %cst_69 = arith.constant dense<0.000000e+00> : vector<8x27xf32>
    %232 = tpu.matmul %231, %15, %cst_69 {dimension_numbers = #tpu.dot_dimension_numbers<[1], [0], [0], [1], [0, 0, 1, 1], [], []>} : vector<8x64xf32>, vector<64x27xf32>, vector<8x27xf32> -> vector<8x27xf32>
    %233 = vector.extract_strided_slice %6 {offsets = [15, 0], sizes = [1, 27], strides = [1, 1]} : vector<24x128xf32> to vector<1x27xf32>
    %234 = vector.broadcast %233 : vector<1x27xf32> to vector<8x27xf32>
    %235 = arith.addf %232, %234 : vector<8x27xf32>
    %cst_70 = arith.constant dense<0.000000e+00> : vector<8x128xf32>
    %236 = tpu.matmul %135, %10, %cst_70 {dimension_numbers = #tpu.dot_dimension_numbers<[1], [0], [0], [1], [0, 0, 1, 1], [], []>} : vector<8x32xf32>, vector<32x128xf32>, vector<8x128xf32> -> vector<8x128xf32>
    %237 = vector.extract_strided_slice %236 {offsets = [0, 0], sizes = [8, 64], strides = [1, 1]} : vector<8x128xf32> to vector<8x64xf32>
    %238 = vector.extract_strided_slice %236 {offsets = [0, 64], sizes = [8, 64], strides = [1, 1]} : vector<8x128xf32> to vector<8x64xf32>
    %239 = vector.shape_cast %237 : vector<8x64xf32> to vector<8x1x64xf32>
    %240 = vector.shape_cast %238 : vector<8x64xf32> to vector<1x8x64xf32>
    %241 = vector.broadcast %239 : vector<8x1x64xf32> to vector<8x8x64xf32>
    %242 = vector.broadcast %240 : vector<1x8x64xf32> to vector<8x8x64xf32>
    %243 = arith.addf %241, %242 : vector<8x8x64xf32>
    %244 = vector.extract_strided_slice %6 {offsets = [16, 0], sizes = [1, 64], strides = [1, 1]} : vector<24x128xf32> to vector<1x64xf32>
    %245 = vector.shape_cast %244 : vector<1x64xf32> to vector<1x1x64xf32>
    %246 = vector.broadcast %245 : vector<1x1x64xf32> to vector<8x8x64xf32>
    %247 = arith.addf %243, %246 : vector<8x8x64xf32>
    %cst_71 = arith.constant 0.000000e+00 : f32
    %248 = vector.broadcast %cst_71 : f32 to vector<8x8x64xf32>
    %249 = arith.maximumf %247, %248 : vector<8x8x64xf32>
    %250 = vector.extract_strided_slice %6 {offsets = [17, 0], sizes = [1, 64], strides = [1, 1]} : vector<24x128xf32> to vector<1x64xf32>
    %251 = vector.extract_strided_slice %6 {offsets = [18, 0], sizes = [1, 64], strides = [1, 1]} : vector<24x128xf32> to vector<1x64xf32>
    %cst_72 = arith.constant dense<0.000000e+00> : vector<8x8xf32>
    %252 = vector.multi_reduction <add>, %249, %cst_72 [2] : vector<8x8x64xf32> to vector<8x8xf32>
    %253 = vector.shape_cast %252 : vector<8x8xf32> to vector<8x8x1xf32>
    %cst_73 = arith.constant 6.400000e+01 : f32
    %254 = vector.broadcast %cst_73 : f32 to vector<8x8x1xf32>
    %255 = arith.divf %253, %254 : vector<8x8x1xf32>
    %256 = vector.broadcast %255 : vector<8x8x1xf32> to vector<8x8x64xf32>
    %257 = arith.subf %249, %256 : vector<8x8x64xf32>
    %258 = arith.mulf %257, %257 : vector<8x8x64xf32>
    %cst_74 = arith.constant dense<0.000000e+00> : vector<8x8xf32>
    %259 = vector.multi_reduction <add>, %258, %cst_74 [2] : vector<8x8x64xf32> to vector<8x8xf32>
    %260 = vector.shape_cast %259 : vector<8x8xf32> to vector<8x8x1xf32>
    %cst_75 = arith.constant 6.400000e+01 : f32
    %261 = vector.broadcast %cst_75 : f32 to vector<8x8x1xf32>
    %262 = arith.divf %260, %261 : vector<8x8x1xf32>
    %263 = vector.broadcast %255 : vector<8x8x1xf32> to vector<8x8x64xf32>
    %264 = arith.subf %249, %263 : vector<8x8x64xf32>
    %cst_76 = arith.constant 9.99999974E-6 : f32
    %265 = vector.broadcast %cst_76 : f32 to vector<8x8x1xf32>
    %266 = arith.addf %262, %265 : vector<8x8x1xf32>
    %267 = math.rsqrt %266 : vector<8x8x1xf32>
    %268 = vector.broadcast %267 : vector<8x8x1xf32> to vector<8x8x64xf32>
    %269 = arith.mulf %264, %268 : vector<8x8x64xf32>
    %270 = vector.shape_cast %250 : vector<1x64xf32> to vector<1x1x64xf32>
    %271 = vector.broadcast %270 : vector<1x1x64xf32> to vector<8x8x64xf32>
    %272 = arith.mulf %269, %271 : vector<8x8x64xf32>
    %273 = vector.shape_cast %251 : vector<1x64xf32> to vector<1x1x64xf32>
    %274 = vector.broadcast %273 : vector<1x1x64xf32> to vector<8x8x64xf32>
    %275 = arith.addf %272, %274 : vector<8x8x64xf32>
    %276 = vector.extract_strided_slice %6 {offsets = [22, 0], sizes = [1, 64], strides = [1, 1]} : vector<24x128xf32> to vector<1x64xf32>
    %277 = vector.shape_cast %276 : vector<1x64xf32> to vector<1x1x64xf32>
    %278 = vector.broadcast %277 : vector<1x1x64xf32> to vector<8x8x64xf32>
    %279 = arith.mulf %275, %278 : vector<8x8x64xf32>
    %cst_77 = arith.constant dense<0.000000e+00> : vector<8x8xf32>
    %280 = vector.multi_reduction <add>, %279, %cst_77 [2] : vector<8x8x64xf32> to vector<8x8xf32>
    %281 = vector.extract_strided_slice %6 {offsets = [19, 0], sizes = [1, 1], strides = [1, 1]} : vector<24x128xf32> to vector<1x1xf32>
    %282 = vector.broadcast %281 : vector<1x1xf32> to vector<8x8xf32>
    %283 = arith.addf %280, %282 : vector<8x8xf32>
    %cst_78 = arith.constant 0.000000e+00 : f32
    %284 = vector.broadcast %cst_78 : f32 to vector<8x5xf32>
    %285 = tpu.concatenate %235, %284 in 1 : vector<8x27xf32>, vector<8x5xf32> -> vector<8x32xf32>
    %cst_79 = arith.constant 0.000000e+00 : f32
    %286 = vector.broadcast %cst_79 : f32 to vector<8x24xf32>
    %287 = tpu.concatenate %283, %286 in 1 : vector<8x8xf32>, vector<8x24xf32> -> vector<8x32xf32>
    %288 = tpu.concatenate %127, %285, %287 in 1 : vector<8x64xf32>, vector<8x32xf32>, vector<8x32xf32> -> vector<8x128xf32>
    %cst_80 = arith.constant 0.000000e+00 : f32
    %289 = vector.broadcast %cst_80 : f32 to vector<1x64xf32>
    %290 = tpu.concatenate %128, %289 in 1 : vector<1x64xf32>, vector<1x64xf32> -> vector<1x128xf32>
    %cst_81 = arith.constant 0.000000e+00 : f32
    %291 = vector.broadcast %cst_81 : f32 to vector<7x128xf32>
    %292 = tpu.concatenate %290, %291 in 0 : vector<1x128xf32>, vector<7x128xf32> -> vector<8x128xf32>
    %293 = tpu.concatenate %288, %292 in 0 : vector<8x128xf32>, vector<8x128xf32> -> vector<16x128xf32>
    %c0_82 = arith.constant 0 : index
    %c0_83 = arith.constant 0 : index
    %c0_84 = arith.constant 0 : index
    %294 = vector.load %arg7[%c0_82, %c0_83, %c0_84] : memref<1x16x128xf32, #tpu.memory_space<vmem>>, vector<1x16x128xf32>
    %295 = vector.shape_cast %294 : vector<1x16x128xf32> to vector<16x128xf32>
    %296 = vector.shape_cast %293 : vector<16x128xf32> to vector<1x16x128xf32>
    tpu.vector_store %arg7[%c0_82, %c0_83, %c0_84], %296 {strides = array<i32>} : memref<1x16x128xf32, #tpu.memory_space<vmem>>, vector<1x16x128xf32>,
    return
  }
  func.func @transform_0(%arg0: i32) -> (i32, i32, i32) {
    %c0_i32 = arith.constant 0 : i32
    %c0_i32_0 = arith.constant 0 : i32
    %c0_i32_1 = arith.constant 0 : i32
    return %arg0, %c0_i32, %c0_i32_0 : i32, i32, i32
  }
  func.func @transform_1(%arg0: i32) -> (i32, i32, i32) {
    %c0_i32 = arith.constant 0 : i32
    %c0_i32_0 = arith.constant 0 : i32
    %c0_i32_1 = arith.constant 0 : i32
    return %arg0, %c0_i32, %c0_i32_0 : i32, i32, i32
  }
  func.func @transform_2(%arg0: i32) -> (i32, i32) {
    %c0_i32 = arith.constant 0 : i32
    %c0_i32_0 = arith.constant 0 : i32
    %c0_i32_1 = arith.constant 0 : i32
    return %c0_i32, %c0_i32_0 : i32, i32
  }
  func.func @transform_3(%arg0: i32) -> (i32, i32) {
    %c0_i32 = arith.constant 0 : i32
    %c0_i32_0 = arith.constant 0 : i32
    %c0_i32_1 = arith.constant 0 : i32
    return %c0_i32, %c0_i32_0 : i32, i32
  }
  func.func @transform_4(%arg0: i32) -> (i32, i32) {
    %c0_i32 = arith.constant 0 : i32
    %c0_i32_0 = arith.constant 0 : i32
    %c0_i32_1 = arith.constant 0 : i32
    return %c0_i32, %c0_i32_0 : i32, i32
  }
  func.func @transform_5(%arg0: i32) -> (i32, i32) {
    %c0_i32 = arith.constant 0 : i32
    %c0_i32_0 = arith.constant 0 : i32
    %c0_i32_1 = arith.constant 0 : i32
    return %c0_i32, %c0_i32_0 : i32, i32
  }
  func.func @transform_6(%arg0: i32) -> (i32, i32, i32) {
    %c0_i32 = arith.constant 0 : i32
    %c0_i32_0 = arith.constant 0 : i32
    %c0_i32_1 = arith.constant 0 : i32
    return %arg0, %c0_i32, %c0_i32_0 : i32, i32, i32
  }
}

</mosaic_0001>

<llo_original>
// kernel: molecular_gvae_forward.1
$region0: #{molecular_gvae_forward.1}
  #allocation0 [shape = 'u32[]', space=smem, size = 0x4, offset = 0x4, fixed_abs, tag = 'smem constant byte address 0x4 - core index']
  #allocation1 [shape = 'u32[144,128]{1,0:T(1,128)}', space=vmem, size = 0x12000, scoped, tag = 'internal scratch']
  %s0 = inlined_call_operand.vmem [shape: f32[4,8,64], index: 0, kind: input, shape index: {}]
  %s1 = inlined_call_operand.vmem [shape: s32[4,2,16], index: 1, kind: input, shape index: {}]
  %s2 = inlined_call_operand.vmem [shape: f32[192,128], index: 2, kind: input, shape index: {}]
  %s3 = inlined_call_operand.vmem [shape: f32[192,64], index: 3, kind: input, shape index: {}]
  %s4 = inlined_call_operand.vmem [shape: f32[128,27], index: 4, kind: input, shape index: {}]
  %s5 = inlined_call_operand.vmem [shape: f32[24,128], index: 5, kind: input, shape index: {}]
  %s6 = inlined_call_operand.vmem [shape: f32[4,16,128], index: 6, kind: output, shape index: {}]
  %s7 = sld [smem:[#allocation0]]
  $region57: #{molecular_gvae_forward.1} parent=0
    _
  %s9 = ssub.s32 1, %s7
  %s10 = scalar_select 0, %s9, %s7
  loop: start=0, step=1, limit=6
  $region2: #{molecular_gvae_forward.1} parent=0 // loop_pre_header
    _
  $region3: #{molecular_gvae_forward.1} parent=0 // loop_header
    %s12 = sphi 0, %s16
    %p13 = scmp.ge.s32.totalorder %s12, 6
    %s22 = sphi 0, %s24
    %s25 = sphi 0, %s22
    %s26 = sphi 0, %s25
    %s42 = sphi 0, %s26
    %s48 = sphi 0, %s50
    %s51 = sphi 0, %s48
    %s52 = sphi 0, %s51
    %s68 = sphi 0, %s52
    %s72 = sphi 0, %s72
    %s74 = sphi 0, %s72
    %s75 = sphi 0, %s74
    %s89 = sphi 0, %s75
    %s93 = sphi 0, %s93
    %s95 = sphi 0, %s93
    %s96 = sphi 0, %s95
    %s110 = sphi 0, %s96
    %s114 = sphi 0, %s114
    %s116 = sphi 0, %s114
    %s117 = sphi 0, %s116
    %s131 = sphi 0, %s117
    %s135 = sphi 0, %s135
    %s137 = sphi 0, %s135
    %s138 = sphi 0, %s137
    %s152 = sphi 0, %s138
    %s158 = sphi 0, %s160
    %s161 = sphi 0, %s158
    %s162 = sphi 0, %s161
    %s178 = sphi 0, %s162
  $region4: #{molecular_gvae_forward.1} parent=0 // loop_header_branch
    %15 = sbr.rel (%p13) target = $region8
  $region5: #{molecular_gvae_forward.1} parent=0 // loop_body
    %s17 = ssub.s32 %s12, 1
    %s18 = ssub.s32 %s12, 2
    %s19 = sadd.s32 %s12, 1
    %s20 = ssub.s32 %s12, %s19
    %p21 = scmp.eq.s32.totalorder %s20, 0
    %s23 = sadd.s32 %s22, 1
    %s24 = scalar_select %p21, %s22, %s23
    %p27 = pneg %p21
    %p28 = scmp.eq.s32.totalorder %s12, 3
    %p29 = por %p27, %p28
    %p30 = scmp.ne.s32.totalorder %s22, %s25
    %p31 = scmp.eq.s32.totalorder %s12, 0
    %p32 = por %p30, %p31
    %p33 = scmp.ne.s32.totalorder %s22, %s25
    %p34 = scmp.eq.s32.totalorder %s17, 3
    %p35 = por %p33, %p34
    %p36 = scmp.ne.s32.totalorder %s25, %s26
    %p37 = scmp.eq.s32.totalorder %s17, 0
    %p38 = por %p36, %p37
    %p39 = scmp.ne.s32.totalorder %s25, %s26
    %p40 = scmp.eq.s32.totalorder %s18, 3
    %p41 = por %p39, %p40
    %p43 = scmp.ne.s32.totalorder %s26, %s42
    %p44 = scmp.eq.s32.totalorder %s18, 0
    %p45 = por %p43, %p44
    %s46 = ssub.s32 %s12, %s19
    %p47 = scmp.eq.s32.totalorder %s46, 0
    %s49 = sadd.s32 %s48, 1
    %s50 = scalar_select %p47, %s48, %s49
    %p53 = pneg %p47
    %p54 = scmp.eq.s32.totalorder %s12, 3
    %p55 = por %p53, %p54
    %p56 = scmp.ne.s32.totalorder %s48, %s51
    %p57 = scmp.eq.s32.totalorder %s12, 0
    %p58 = por %p56, %p57
    %p59 = scmp.ne.s32.totalorder %s48, %s51
    %p60 = scmp.eq.s32.totalorder %s17, 3
    %p61 = por %p59, %p60
    %p62 = scmp.ne.s32.totalorder %s51, %s52
    %p63 = scmp.eq.s32.totalorder %s17, 0
    %p64 = por %p62, %p63
    %p65 = scmp.ne.s32.totalorder %s51, %s52
    %p66 = scmp.eq.s32.totalorder %s18, 3
    %p67 = por %p65, %p66
    %p69 = scmp.ne.s32.totalorder %s52, %s68
    %p70 = scmp.eq.s32.totalorder %s18, 0
    %p71 = por %p69, %p70
    %s73 = sadd.s32 %s72, 1
    %p76 = scmp.eq.s32.totalorder %s12, 3
    %p77 = scmp.ne.s32.totalorder %s72, %s74
    %p78 = scmp.eq.s32.totalorder %s12, 0
    %p79 = por %p77, %p78
    %p80 = scmp.ne.s32.totalorder %s72, %s74
    %p81 = scmp.eq.s32.totalorder %s17, 3
    %p82 = por %p80, %p81
    %p83 = scmp.ne.s32.totalorder %s74, %s75
    %p84 = scmp.eq.s32.totalorder %s17, 0
    %p85 = por %p83, %p84
    %p86 = scmp.ne.s32.totalorder %s74, %s75
    %p87 = scmp.eq.s32.totalorder %s18, 3
    %p88 = por %p86, %p87
    %p90 = scmp.ne.s32.totalorder %s75, %s89
    %p91 = scmp.eq.s32.totalorder %s18, 0
    %p92 = por %p90, %p91
    %s94 = sadd.s32 %s93, 1
    %p97 = scmp.eq.s32.totalorder %s12, 3
    %p98 = scmp.ne.s32.totalorder %s93, %s95
    %p99 = scmp.eq.s32.totalorder %s12, 0
    %p100 = por %p98, %p99
    %p101 = scmp.ne.s32.totalorder %s93, %s95
    %p102 = scmp.eq.s32.totalorder %s17, 3
    %p103 = por %p101, %p102
    %p104 = scmp.ne.s32.totalorder %s95, %s96
    %p105 = scmp.eq.s32.totalorder %s17, 0
    %p106 = por %p104, %p105
    %p107 = scmp.ne.s32.totalorder %s95, %s96
    %p108 = scmp.eq.s32.totalorder %s18, 3
    %p109 = por %p107, %p108
    %p111 = scmp.ne.s32.totalorder %s96, %s110
    %p112 = scmp.eq.s32.totalorder %s18, 0
    %p113 = por %p111, %p112
    %s115 = sadd.s32 %s114, 1
    %p118 = scmp.eq.s32.totalorder %s12, 3
    %p119 = scmp.ne.s32.totalorder %s114, %s116
    %p120 = scmp.eq.s32.totalorder %s12, 0
    %p121 = por %p119, %p120
    %p122 = scmp.ne.s32.totalorder %s114, %s116
    %p123 = scmp.eq.s32.totalorder %s17, 3
    %p124 = por %p122, %p123
    %p125 = scmp.ne.s32.totalorder %s116, %s117
    %p126 = scmp.eq.s32.totalorder %s17, 0
    %p127 = por %p125, %p126
    %p128 = scmp.ne.s32.totalorder %s116, %s117
    %p129 = scmp.eq.s32.totalorder %s18, 3
    %p130 = por %p128, %p129
    %p132 = scmp.ne.s32.totalorder %s117, %s131
    %p133 = scmp.eq.s32.totalorder %s18, 0
    %p134 = por %p132, %p133
    %s136 = sadd.s32 %s135, 1
    %p139 = scmp.eq.s32.totalorder %s12, 3
    %p140 = scmp.ne.s32.totalorder %s135, %s137
    %p141 = scmp.eq.s32.totalorder %s12, 0
    %p142 = por %p140, %p141
    %p143 = scmp.ne.s32.totalorder %s135, %s137
    %p144 = scmp.eq.s32.totalorder %s17, 3
    %p145 = por %p143, %p144
    %p146 = scmp.ne.s32.totalorder %s137, %s138
    %p147 = scmp.eq.s32.totalorder %s17, 0
    %p148 = por %p146, %p147
    %p149 = scmp.ne.s32.totalorder %s137, %s138
    %p150 = scmp.eq.s32.totalorder %s18, 3
    %p151 = por %p149, %p150
    %p153 = scmp.ne.s32.totalorder %s138, %s152
    %p154 = scmp.eq.s32.totalorder %s18, 0
    %p155 = por %p153, %p154
    %s156 = ssub.s32 %s12, %s19
    %p157 = scmp.eq.s32.totalorder %s156, 0
    %s159 = sadd.s32 %s158, 1
    %s160 = scalar_select %p157, %s158, %s159
    %p163 = pneg %p157
    %p164 = scmp.eq.s32.totalorder %s12, 3
    %p165 = por %p163, %p164
    %p166 = scmp.ne.s32.totalorder %s158, %s161
    %p167 = scmp.eq.s32.totalorder %s12, 0
    %p168 = por %p166, %p167
    %p169 = scmp.ne.s32.totalorder %s158, %s161
    %p170 = scmp.eq.s32.totalorder %s17, 3
    %p171 = por %p169, %p170
    %p172 = scmp.ne.s32.totalorder %s161, %s162
    %p173 = scmp.eq.s32.totalorder %s17, 0
    %p174 = por %p172, %p173
    %p175 = scmp.ne.s32.totalorder %s161, %s162
    %p176 = scmp.eq.s32.totalorder %s18, 3
    %p177 = por %p175, %p176
    %p179 = scmp.ne.s32.totalorder %s162, %s178
    %p180 = scmp.eq.s32.totalorder %s18, 0
    %p181 = por %p179, %p180
    %p182 = scmp.le.s32.totalorder 1, %s12
    %p183 = scmp.lt.s32.totalorder %s12, 5
    %p184 = pnand %p182, %p183
    %p185 = pneg %p184
    // Predicated region
    $region9: #{molecular_gvae_forward.1} parent=5 // pred_check
      _
    $region10: #{molecular_gvae_forward.1} parent=5 // pred_check_branch
      %187 = sbr.rel (%p184) target = $region12
    $region11: #{molecular_gvae_forward.1} parent=5 // pred_region
      %s188 = ssub.s32 %s12, 1
      // Predicated region
      $region13: #{molecular_gvae_forward.1} parent=11 // pred_check
        %p189 = pneg %p85
      $region14: #{molecular_gvae_forward.1} parent=11 // pred_check_branch
        %191 = sbr.rel (%p189) target = $region16
      $region15: #{molecular_gvae_forward.1} parent=11 // pred_region
        _
      $region16: #{molecular_gvae_forward.1} parent=11 // pred_fallthru
        _
      // Predicated region
      $region17: #{molecular_gvae_forward.1} parent=11 // pred_check
        %p192 = pneg %p106
      $region18: #{molecular_gvae_forward.1} parent=11 // pred_check_branch
        %194 = sbr.rel (%p192) target = $region20
      $region19: #{molecular_gvae_forward.1} parent=11 // pred_region
        _
      $region20: #{molecular_gvae_forward.1} parent=11 // pred_fallthru
        _
      // Predicated region
      $region21: #{molecular_gvae_forward.1} parent=11 // pred_check
        %p195 = pneg %p127
      $region22: #{molecular_gvae_forward.1} parent=11 // pred_check_branch
        %197 = sbr.rel (%p195) target = $region24
      $region23: #{molecular_gvae_forward.1} parent=11 // pred_region
        _
      $region24: #{molecular_gvae_forward.1} parent=11 // pred_fallthru
        _
      // Predicated region
      $region25: #{molecular_gvae_forward.1} parent=11 // pred_check
        %p198 = pneg %p148
      $region26: #{molecular_gvae_forward.1} parent=11 // pred_check_branch
        %200 = sbr.rel (%p198) target = $region28
      $region27: #{molecular_gvae_forward.1} parent=11 // pred_region
        _
      $region28: #{molecular_gvae_forward.1} parent=11 // pred_fallthru
        _
    $region12: #{molecular_gvae_forward.1} parent=5 // pred_fallthru
      _
    %p201 = scmp.lt.s32.totalorder %s12, 4
    // Predicated region
    $region29: #{molecular_gvae_forward.1} parent=5 // pred_check
      %p202 = pneg %p201
    $region30: #{molecular_gvae_forward.1} parent=5 // pred_check_branch
      %204 = sbr.rel (%p202) target = $region32
    $region31: #{molecular_gvae_forward.1} parent=5 // pred_region
      // Predicated region
      $region33: #{molecular_gvae_forward.1} parent=31 // pred_check
        %p205 = pneg %p32
      $region34: #{molecular_gvae_forward.1} parent=31 // pred_check_branch
        %207 = sbr.rel (%p205) target = $region36
      $region35: #{molecular_gvae_forward.1} parent=31 // pred_region
        %p208 = scmp.lt.s32.totalorder %s12, 3
        %s209 = scalar_select %p208, %s12, 3
        %s210 = smul.addr %s209, 8
        %s211 = scalar_lea.vmem %s0, %s210
      $region36: #{molecular_gvae_forward.1} parent=31 // pred_fallthru
        _
      // Predicated region
      $region37: #{molecular_gvae_forward.1} parent=31 // pred_check
        %p212 = pneg %p58
      $region38: #{molecular_gvae_forward.1} parent=31 // pred_check_branch
        %214 = sbr.rel (%p212) target = $region40
      $region39: #{molecular_gvae_forward.1} parent=31 // pred_region
        %p215 = scmp.lt.s32.totalorder %s12, 3
        %s216 = scalar_select %p215, %s12, 3
        %s217 = smul.addr %s216, 2
        %s218 = scalar_lea.vmem %s1, %s217
      $region40: #{molecular_gvae_forward.1} parent=31 // pred_fallthru
        _
    $region32: #{molecular_gvae_forward.1} parent=5 // pred_fallthru
      _
    %p219 = scmp.le.s32.totalorder 1, %s12
    %p220 = scmp.lt.s32.totalorder %s12, 5
    %p221 = pnand %p219, %p220
    %p222 = pneg %p221
    // Predicated region
    $region41: #{molecular_gvae_forward.1} parent=5 // pred_check
      _
    $region42: #{molecular_gvae_forward.1} parent=5 // pred_check_branch
      %224 = sbr.rel (%p221) target = $region44
    $region43: #{molecular_gvae_forward.1} parent=5 // pred_region
      %s225 = ssub.s32 %s12, 1
      %p226 = scmp.lt.s32.totalorder %s17, 3
      %s227 = scalar_select %p226, %s17, 3
      %s228 = smul.addr %s227, 8
      %s229 = scalar_lea.vmem %s0, %s228
      %p230 = pneg %p38
      %p231 = pneg %p35
      %p232 = scmp.lt.s32.totalorder %s17, 3
      %s233 = scalar_select %p232, %s17, 3
      %s234 = smul.addr %s233, 2
      %s235 = scalar_lea.vmem %s1, %s234
      %p236 = pneg %p64
      %p237 = pneg %p61
      %p238 = pneg %p85
      %p239 = pneg %p82
      %p240 = pneg %p106
      %p241 = pneg %p103
      %p242 = pneg %p127
      %p243 = pneg %p124
      %p244 = pneg %p148
      %p245 = pneg %p145
      %p246 = pneg %p174
      %p247 = pneg %p171
      %p248 = scmp.lt.s32.totalorder %s17, 3
      %s249 = scalar_select %p248, %s17, 3
      %s250 = smul.addr %s249, 2
      %s251 = smul.addr %s250, 8
      %s252 = scalar_lea.vmem %s6, %s251
      %p253 = scmp.lt.s32.totalorder %s17, 3
      %s254 = scalar_select %p253, %s17, 3
      %s255 = smul.addr %s254, 8
      %s256 = scalar_lea.vmem %s0, %s255
      %p257 = scmp.lt.s32.totalorder %s17, 3
      %s258 = scalar_select %p257, %s17, 3
      %s259 = smul.addr %s258, 2
      %s260 = scalar_lea.vmem %s1, %s259
      %p261 = scmp.lt.s32.totalorder %s17, 3
      %s262 = scalar_select %p261, %s17, 3
      %s263 = smul.addr %s262, 2
      %s264 = smul.addr %s263, 8
      %s265 = scalar_lea.vmem %s6, %s264
      %v266 = vld [vmem:[%s256] sm:$0xff]
      %v267 = vld [vmem:[%s260] sm:$0x3]
      %v268 = vld [vmem:[%s5] sm:$0xff]
      %v269 = vld [vmem:[%s5 + $0x8] sm:$0xff]
      %v270 = vld [vmem:[%s5 + $0x10] sm:$0xff]
      %v271 = vld [vmem:[%s2] sm:$0xff]
      %v272 = vld [vmem:[%s2 + $0x8] sm:$0xff]
      %v273 = vld [vmem:[%s2 + $0x10] sm:$0xff]
      %v274 = vld [vmem:[%s2 + $0x18] sm:$0xff]
      %v275 = vld [vmem:[%s2 + $0x20] sm:$0xff]
      %v276 = vld [vmem:[%s2 + $0x28] sm:$0xff]
      %v277 = vld [vmem:[%s2 + $0x30] sm:$0xff]
      %v278 = vld [vmem:[%s2 + $0x38] sm:$0xff]
      %v279 = vld [vmem:[%s2 + $0x40] sm:$0xff]
      %v280 = vld [vmem:[%s2 + $0x48] sm:$0xff]
      %v281 = vld [vmem:[%s2 + $0x50] sm:$0xff]
      %v282 = vld [vmem:[%s2 + $0x58] sm:$0xff]
      %v283 = vld [vmem:[%s2 + $0x60] sm:$0xff]
      %v284 = vld [vmem:[%s2 + $0x68] sm:$0xff]
      %v285 = vld [vmem:[%s2 + $0x70] sm:$0xff]
      %v286 = vld [vmem:[%s2 + $0x78] sm:$0xff]
      %v287 = vld [vmem:[%s2 + $0x80] sm:$0xff]
      %v288 = vld [vmem:[%s2 + $0x88] sm:$0xff]
      %v289 = vld [vmem:[%s2 + $0x90] sm:$0xff]
      %v290 = vld [vmem:[%s2 + $0x98] sm:$0xff]
      %v291 = vld [vmem:[%s2 + $0xa0] sm:$0xff]
      %v292 = vld [vmem:[%s2 + $0xa8] sm:$0xff]
      %v293 = vld [vmem:[%s2 + $0xb0] sm:$0xff]
      %v294 = vld [vmem:[%s2 + $0xb8] sm:$0xff]
      %v295 = vld [vmem:[%s3] sm:$0xff]
      %v296 = vld [vmem:[%s3 + $0x8] sm:$0xff]
      %v297 = vld [vmem:[%s3 + $0x10] sm:$0xff]
      %v298 = vld [vmem:[%s3 + $0x18] sm:$0xff]
      %v299 = vld [vmem:[%s3 + $0x20] sm:$0xff]
      %v300 = vld [vmem:[%s3 + $0x28] sm:$0xff]
      %v301 = vld [vmem:[%s3 + $0x30] sm:$0xff]
      %v302 = vld [vmem:[%s3 + $0x38] sm:$0xff]
      %v303 = vld [vmem:[%s3 + $0x40] sm:$0xff]
      %v304 = vld [vmem:[%s3 + $0x48] sm:$0xff]
      %v305 = vld [vmem:[%s3 + $0x50] sm:$0xff]
      %v306 = vld [vmem:[%s3 + $0x58] sm:$0xff]
      %v307 = vld [vmem:[%s3 + $0x60] sm:$0xff]
      %v308 = vld [vmem:[%s3 + $0x68] sm:$0xff]
      %v309 = vld [vmem:[%s3 + $0x70] sm:$0xff]
      %v310 = vld [vmem:[%s3 + $0x78] sm:$0xff]
      %v311 = vld [vmem:[%s3 + $0x80] sm:$0xff]
      %v312 = vld [vmem:[%s3 + $0x88] sm:$0xff]
      %v313 = vld [vmem:[%s3 + $0x90] sm:$0xff]
      %v314 = vld [vmem:[%s3 + $0x98] sm:$0xff]
      %v315 = vld [vmem:[%s3 + $0xa0] sm:$0xff]
      %v316 = vld [vmem:[%s3 + $0xa8] sm:$0xff]
      %v317 = vld [vmem:[%s3 + $0xb0] sm:$0xff]
      %v318 = vld [vmem:[%s3 + $0xb8] sm:$0xff]
      %v319 = vld [vmem:[%s4] sm:$0xff]
      %v320 = vld [vmem:[%s4 + $0x8] sm:$0xff]
      %v321 = vld [vmem:[%s4 + $0x10] sm:$0xff]
      %v322 = vld [vmem:[%s4 + $0x18] sm:$0xff]
      %v323 = vld [vmem:[%s4 + $0x20] sm:$0xff]
      %v324 = vld [vmem:[%s4 + $0x28] sm:$0xff]
      %v325 = vld [vmem:[%s4 + $0x30] sm:$0xff]
      %v326 = vld [vmem:[%s4 + $0x38] sm:$0xff]
      %v327 = vld [vmem:[%s4 + $0x40] sm:$0xff]
      %v328 = vld [vmem:[%s4 + $0x48] sm:$0xff]
      %v329 = vld [vmem:[%s4 + $0x50] sm:$0xff]
      %v330 = vld [vmem:[%s4 + $0x58] sm:$0xff]
      %v331 = vld [vmem:[%s4 + $0x60] sm:$0xff]
      %v332 = vld [vmem:[%s4 + $0x68] sm:$0xff]
      %v333 = vld [vmem:[%s4 + $0x70] sm:$0xff]
      %v334 = vld [vmem:[%s4 + $0x78] sm:$0xff]
      %v335 = vlaneseq
      %v336 = vshrl.u32 %v335, 7
      %v337 = vlaneseq
      %v338 = vshrl.u32 %v337, 7
      %v339 = vsub.s32 1, %v338
      %v340 = vrot.slane %v267, %v339
      %vm341 = vcmp.eq.s32.totalorder %v336, %v340
      %v342 = vsel %vm341, 1, 0
      %v343 = vcvt.s32.f32 %v342
      %v344 = vlaneseq
      %v345 = vshrl.u32 %v344, 7
      %v346 = vsub.s32 0, %v345
      %v347 = vrot.slane %v267, %v346
      %vm348 = vcmp.eq.s32.totalorder %v336, %v347
      %v349 = vsel %vm348, 1, 0
      %v350 = vcvt.s32.f32 %v349
      %v351 = vlaneseq
      %v352 = vand.u32 %v351, 127
      %vm353 = vcmp.eq.s32.totalorder %v336, %v352
      %v354 = vsel %vm353, 1, 0
      %v355 = vcvt.s32.f32 %v354
      %vm356 = vcmask 130048
      %v358 = vsel %vm356, %v343, 0
      %v361 = vsel %vm356, %v350, 0
      %363 = vmatprep.subr.mxu0 0.0
      %364 = vmatpush1.xpose.msra.mxu0 %v361
      %365 = vmatprep.subr.mxu0 0.0
      %366 = vmatpush1.xpose.msra.mxu0 0.0
      %367 = vmatprep.subr.mxu0 0.0
      %368 = vmatpush1.xpose.msra.mxu0 0.0
      %369 = vmatprep.subr.mxu0 0.0
      %370 = vmatpush1.xpose.msra.mxu0 0.0
      %371 = vmatprep.subr.mxu0 0.0
      %372 = vmatpush1.xpose.msra.mxu0 0.0
      %373 = vmatprep.subr.mxu0 0.0
      %374 = vmatpush1.xpose.msra.mxu0 0.0
      %375 = vmatprep.subr.mxu0 0.0
      %376 = vmatpush1.xpose.msra.mxu0 0.0
      %377 = vmatprep.subr.mxu0 0.0
      %378 = vmatpush1.xpose.msra.mxu0 0.0
      %379 = vmatprep.subr.mxu0 0.0
      %380 = vmatpush1.xpose.msra.mxu0 0.0
      %381 = vmatprep.subr.mxu0 0.0
      %382 = vmatpush1.xpose.msra.mxu0 0.0
      %383 = vmatprep.subr.mxu0 0.0
      %384 = vmatpush1.xpose.msra.mxu0 0.0
      %385 = vmatprep.subr.mxu0 0.0
      %386 = vmatpush1.xpose.msra.mxu0 0.0
      %387 = vmatprep.subr.mxu0 0.0
      %388 = vmatpush1.xpose.msra.mxu0 0.0
      %389 = vmatprep.subr.mxu0 0.0
      %390 = vmatpush1.xpose.msra.mxu0 0.0
      %391 = vmatprep.subr.mxu0 0.0
      %392 = vmatpush1.xpose.msra.mxu0 0.0
      %393 = vmatprep.subr.mxu0 0.0
      %394 = vmatpush1.xpose.msra.mxu0 0.0
      %395 = vmatprep.subr.mxu0 0.0
      %396 = vmatpush1.xpose.msra.mxu0 0.0
      %397 = vmatprep.subr.mxu0 0.0
      %398 = vmatpush1.xpose.msra.mxu0 0.0
      %399 = vmatprep.subr.mxu0 0.0
      %400 = vmatpush1.xpose.msra.mxu0 0.0
      %401 = vmatprep.subr.mxu0 0.0
      %402 = vmatpush1.xpose.msra.mxu0 0.0
      %403 = vmatprep.subr.mxu0 0.0
      %404 = vmatpush1.xpose.msra.mxu0 0.0
      %405 = vmatprep.subr.mxu0 0.0
      %406 = vmatpush1.xpose.msra.mxu0 0.0
      %407 = vmatprep.subr.mxu0 0.0
      %408 = vmatpush1.xpose.msra.mxu0 0.0
      %409 = vmatprep.subr.mxu0 0.0
      %410 = vmatpush1.xpose.msra.mxu0 0.0
      %411 = vmatprep.subr.mxu0 0.0
      %412 = vmatpush1.xpose.msra.mxu0 0.0
      %413 = vmatprep.subr.mxu0 0.0
      %414 = vmatpush1.xpose.msra.mxu0 0.0
      %415 = vmatprep.subr.mxu0 0.0
      %416 = vmatpush1.xpose.msra.mxu0 0.0
      %417 = vmatprep.subr.mxu0 0.0
      %418 = vmatpush1.xpose.msra.mxu0 0.0
      %419 = vmatprep.subr.mxu0 0.0
      %420 = vmatpush1.xpose.msra.mxu0 0.0
      %421 = vmatprep.subr.mxu0 0.0
      %422 = vmatpush1.xpose.msra.mxu0 0.0
      %423 = vmatprep.subr.mxu0 0.0
      %424 = vmatpush1.xpose.msra.mxu0 0.0
      %425 = vmatprep.subr.mxu0 0.0
      %426 = vmatpush1.xpose.msra.mxu0 0.0
      %427 = vmatprep.mubr.f32.mxu0 0.0
      %428 = vmatmul.mubr.f32.gmra.mrb[0].mxu0 %v358
      %v429 = vpop.f32.mrb[0].mxu0
      %v430 = vadd.f32 %v355, %v429
      %v431 = vpop.f32.mrb[0].mxu0
      %432 = vdwg.mxu0
      %vm433 = vcmp.gt.f32.partialorder %v430, 0.0
      %v434 = vlaneseq
      %v435 = vshrl.u32 %v434, 7
      %v436 = vsub.s32 0, %v435
      %v437 = vrot.slane %v268, %v436
      %vm438 = vcmask 261120
      %v440 = vsel %vm438, %v266, 0
      %442 = vmatprep.subr.mxu0 0.0
      %443 = vmatpush1.msra.mxu0 %v271
      %444 = vmatprep.subr.mxu0 0.0
      %445 = vmatpush1.msra.mxu0 %v272
      %446 = vmatprep.subr.mxu0 0.0
      %447 = vmatpush1.msra.mxu0 %v273
      %448 = vmatprep.subr.mxu0 0.0
      %449 = vmatpush1.msra.mxu0 %v274
      %450 = vmatprep.subr.mxu0 0.0
      %451 = vmatpush1.msra.mxu0 0.0
      %452 = vmatprep.subr.mxu0 0.0
      %453 = vmatpush1.msra.mxu0 0.0
      %454 = vmatprep.subr.mxu0 0.0
      %455 = vmatpush1.msra.mxu0 0.0
      %456 = vmatprep.subr.mxu0 0.0
      %457 = vmatpush1.msra.mxu0 0.0
      %458 = vmatprep.subr.mxu0 0.0
      %459 = vmatpush1.msra.mxu0 0.0
      %460 = vmatprep.subr.mxu0 0.0
      %461 = vmatpush1.msra.mxu0 0.0
      %462 = vmatprep.subr.mxu0 0.0
      %463 = vmatpush1.msra.mxu0 0.0
      %464 = vmatprep.subr.mxu0 0.0
      %465 = vmatpush1.msra.mxu0 0.0
      %466 = vmatprep.subr.mxu0 0.0
      %467 = vmatpush1.msra.mxu0 0.0
      %468 = vmatprep.subr.mxu0 0.0
      %469 = vmatpush1.msra.mxu0 0.0
      %470 = vmatprep.subr.mxu0 0.0
      %471 = vmatpush1.msra.mxu0 0.0
      %472 = vmatprep.subr.mxu0 0.0
      %473 = vmatpush1.msra.mxu0 0.0
      %474 = vmatprep.subr.mxu0 0.0
      %475 = vmatpush1.msra.mxu0 0.0
      %476 = vmatprep.subr.mxu0 0.0
      %477 = vmatpush1.msra.mxu0 0.0
      %478 = vmatprep.subr.mxu0 0.0
      %479 = vmatpush1.msra.mxu0 0.0
      %480 = vmatprep.subr.mxu0 0.0
      %481 = vmatpush1.msra.mxu0 0.0
      %482 = vmatprep.subr.mxu0 0.0
      %483 = vmatpush1.msra.mxu0 0.0
      %484 = vmatprep.subr.mxu0 0.0
      %485 = vmatpush1.msra.mxu0 0.0
      %486 = vmatprep.subr.mxu0 0.0
      %487 = vmatpush1.msra.mxu0 0.0
      %488 = vmatprep.subr.mxu0 0.0
      %489 = vmatpush1.msra.mxu0 0.0
      %490 = vmatprep.subr.mxu0 0.0
      %491 = vmatpush1.msra.mxu0 0.0
      %492 = vmatprep.subr.mxu0 0.0
      %493 = vmatpush1.msra.mxu0 0.0
      %494 = vmatprep.subr.mxu0 0.0
      %495 = vmatpush1.msra.mxu0 0.0
      %496 = vmatprep.subr.mxu0 0.0
      %497 = vmatpush1.msra.mxu0 0.0
      %498 = vmatprep.subr.mxu0 0.0
      %499 = vmatpush1.msra.mxu0 0.0
      %500 = vmatprep.subr.mxu0 0.0
      %501 = vmatpush1.msra.mxu0 0.0
      %502 = vmatprep.subr.mxu0 0.0
      %503 = vmatpush1.msra.mxu0 0.0
      %504 = vmatprep.subr.mxu0 0.0
      %505 = vmatpush1.msra.mxu0 0.0
      %506 = vmatprep.mubr.f32.mxu0 0.0
      %507 = vmatmul.mubr.f32.gmra.mrb[0].mxu0 %v440
      %v508 = vpop.f32.mrb[0].mxu0
      %v509 = vadd.f32 %v437, %v508
      %v510 = vpop.f32.mrb[0].mxu0
      %511 = vdwg.mxu0
      %v513 = vcombine.high %v509, %v509
      %v515 = vunpack.c.l.s4 1966171168
      %v516 = vunpack.c.0.s8 %v515
      %v517 = vlaneseq
      %v518 = vshrl.u32 %v517, 7
      %v519 = vsub.s32 %v516, %v518
      %v520 = vrot.slane %v509, %v519
      %v522 = vunpack.c.l.s4 1966171168
      %v523 = vunpack.c.0.s8 %v522
      %v524 = vlaneseq
      %v525 = vshrl.u32 %v524, 7
      %v526 = vsub.s32 %v523, %v525
      %v527 = vrot.slane %v513, %v526
      %v528 = vcombine.high %v520, %v520
      %v529 = vcombine.high %v527, %v527
      %v531 = vunpack.c.l.s4 1966171168
      %v532 = vunpack.c.0.s8 %v531
      %v533 = vlaneseq
      %v534 = vshrl.u32 %v533, 7
      %v535 = vsub.s32 %v532, %v534
      %v536 = vrot.slane %v520, %v535
      %v538 = vunpack.c.l.s4 1966171168
      %v539 = vunpack.c.0.s8 %v538
      %v540 = vlaneseq
      %v541 = vshrl.u32 %v540, 7
      %v542 = vsub.s32 %v539, %v541
      %v543 = vrot.slane %v527, %v542
      %v545 = vunpack.c.l.s4 1966171168
      %v546 = vunpack.c.0.s8 %v545
      %v547 = vlaneseq
      %v548 = vshrl.u32 %v547, 7
      %v549 = vsub.s32 %v546, %v548
      %v550 = vrot.slane %v528, %v549
      %v552 = vunpack.c.l.s4 1966171168
      %v553 = vunpack.c.0.s8 %v552
      %v554 = vlaneseq
      %v555 = vshrl.u32 %v554, 7
      %v556 = vsub.s32 %v553, %v555
      %v557 = vrot.slane %v529, %v556
      %v558 = vcombine.high %v536, %v536
      %v559 = vcombine.high %v543, %v543
      %v560 = vcombine.high %v550, %v550
      %v561 = vcombine.high %v557, %v557
      %v562 = vlaneseq
      %v563 = vshrl.u32 %v562, 7
      %v564 = vsub.s32 0, %v563
      %v565 = vrot.slane %v536, %v564
      %v566 = vlaneseq
      %v567 = vshrl.u32 %v566, 7
      %v568 = vsub.s32 0, %v567
      %v569 = vrot.slane %v550, %v568
      %v570 = vlaneseq
      %v571 = vshrl.u32 %v570, 7
      %v572 = vsub.s32 0, %v571
      %v573 = vrot.slane %v558, %v572
      %v574 = vlaneseq
      %v575 = vshrl.u32 %v574, 7
      %v576 = vsub.s32 0, %v575
      %v577 = vrot.slane %v560, %v576
      %v578 = vlaneseq
      %v579 = vshrl.u32 %v578, 7
      %v580 = vsub.s32 0, %v579
      %v581 = vrot.slane %v543, %v580
      %v582 = vlaneseq
      %v583 = vshrl.u32 %v582, 7
      %v584 = vsub.s32 0, %v583
      %v585 = vrot.slane %v557, %v584
      %v586 = vlaneseq
      %v587 = vshrl.u32 %v586, 7
      %v588 = vsub.s32 0, %v587
      %v589 = vrot.slane %v559, %v588
      %v590 = vlaneseq
      %v591 = vshrl.u32 %v590, 7
      %v592 = vsub.s32 0, %v591
      %v593 = vrot.slane %v561, %v592
      %602 = vrot.lane.b32.xlu0 %v509, 64
      %v603 = vpop.permute.xlu0 %602
      %v605 = vadd.f32 %v565, %v603
      %v606 = vadd.f32 %v569, %v603
      %v607 = vadd.f32 %v573, %v603
      %v608 = vadd.f32 %v577, %v603
      %v609 = vadd.f32 %v581, %v603
      %v610 = vadd.f32 %v585, %v603
      %v611 = vadd.f32 %v589, %v603
      %v612 = vadd.f32 %v593, %v603
      %vm613 = vcmp.gt.f32.partialorder %v605, 0.0
      %vm614 = vcmp.gt.f32.partialorder %v606, 0.0
      %vm615 = vcmp.gt.f32.partialorder %v607, 0.0
      %vm616 = vcmp.gt.f32.partialorder %v608, 0.0
      %vm617 = vcmp.gt.f32.partialorder %v609, 0.0
      %vm618 = vcmp.gt.f32.partialorder %v610, 0.0
      %vm619 = vcmp.gt.f32.partialorder %v611, 0.0
      %vm620 = vcmp.gt.f32.partialorder %v612, 0.0
      %v621 = vmul.f32 %v605, 0.2
      %v622 = vmul.f32 %v606, 0.2
      %v623 = vmul.f32 %v607, 0.2
      %v624 = vmul.f32 %v608, 0.2
      %v625 = vmul.f32 %v609, 0.2
      %v626 = vmul.f32 %v610, 0.2
      %v627 = vmul.f32 %v611, 0.2
      %v628 = vmul.f32 %v612, 0.2
      %v629 = vsel %vm613, %v605, %v621
      %v630 = vsel %vm614, %v606, %v622
      %v631 = vsel %vm615, %v607, %v623
      %v632 = vsel %vm616, %v608, %v624
      %v633 = vsel %vm617, %v609, %v625
      %v634 = vsel %vm618, %v610, %v626
      %v635 = vsel %vm619, %v611, %v627
      %v636 = vsel %vm620, %v612, %v628
      %v637 = vlaneseq
      %v638 = vshrl.u32 %v637, 7
      %v639 = vsub.s32 4, %v638
      %v640 = vrot.slane %v270, %v639
      %642 = vrot.lane.b32.xlu0 %v640, 64
      %v643 = vpop.permute.xlu0 %642
      %v645 = vmul.f32 %v629, %v643
      %v646 = vmul.f32 %v630, %v643
      %v647 = vmul.f32 %v631, %v643
      %v648 = vmul.f32 %v632, %v643
      %v649 = vmul.f32 %v633, %v643
      %v650 = vmul.f32 %v634, %v643
      %v651 = vmul.f32 %v635, %v643
      %v652 = vmul.f32 %v636, %v643
      %661 = vrot.lane.b32.xlu0 %v645, 64
      %v662 = vpop.permute.xlu0 %661
      %663 = vrot.lane.b32.xlu0 %v646, 64
      %v664 = vpop.permute.xlu0 %663
      %665 = vrot.lane.b32.xlu0 %v647, 64
      %v666 = vpop.permute.xlu0 %665
      %667 = vrot.lane.b32.xlu0 %v648, 64
      %v668 = vpop.permute.xlu0 %667
      %669 = vrot.lane.b32.xlu0 %v649, 64
      %v670 = vpop.permute.xlu0 %669
      %671 = vrot.lane.b32.xlu0 %v650, 64
      %v672 = vpop.permute.xlu0 %671
      %673 = vrot.lane.b32.xlu0 %v651, 64
      %v674 = vpop.permute.xlu0 %673
      %675 = vrot.lane.b32.xlu0 %v652, 64
      %v676 = vpop.permute.xlu0 %675
      %vm685 = vcmask 523264
      %v686 = vsel %vm685, %v662, 0.0
      %687 = vadd.xlane.f32.xlu0 %v686
      %v688 = vpop.xlane.xlu0 %687
      %v689 = vsel %vm685, %v664, 0.0
      %690 = vadd.xlane.f32.xlu0 %v689
      %v691 = vpop.xlane.xlu0 %690
      %v692 = vsel %vm685, %v666, 0.0
      %693 = vadd.xlane.f32.xlu0 %v692
      %v694 = vpop.xlane.xlu0 %693
      %v695 = vsel %vm685, %v668, 0.0
      %696 = vadd.xlane.f32.xlu0 %v695
      %v697 = vpop.xlane.xlu0 %696
      %v698 = vsel %vm685, %v670, 0.0
      %699 = vadd.xlane.f32.xlu0 %v698
      %v700 = vpop.xlane.xlu0 %699
      %v701 = vsel %vm685, %v672, 0.0
      %702 = vadd.xlane.f32.xlu0 %v701
      %v703 = vpop.xlane.xlu0 %702
      %v704 = vsel %vm685, %v674, 0.0
      %705 = vadd.xlane.f32.xlu0 %v704
      %v706 = vpop.xlane.xlu0 %705
      %v707 = vsel %vm685, %v676, 0.0
      %708 = vadd.xlane.f32.xlu0 %v707
      %v709 = vpop.xlane.xlu0 %708
      %v718 = vlaneseq
      %v719 = vshrl.u32 %v718, 7
      %v720 = vsub.s32 %v352, %v719
      %v721 = vrot.slane %v688, %v720
      %v722 = vlaneseq
      %v723 = vshrl.u32 %v722, 7
      %v724 = vsub.s32 %v352, %v723
      %v725 = vrot.slane %v691, %v724
      %v726 = vlaneseq
      %v727 = vshrl.u32 %v726, 7
      %v728 = vsub.s32 %v352, %v727
      %v729 = vrot.slane %v694, %v728
      %v730 = vlaneseq
      %v731 = vshrl.u32 %v730, 7
      %v732 = vsub.s32 %v352, %v731
      %v733 = vrot.slane %v697, %v732
      %v734 = vlaneseq
      %v735 = vshrl.u32 %v734, 7
      %v736 = vsub.s32 %v352, %v735
      %v737 = vrot.slane %v700, %v736
      %v738 = vlaneseq
      %v739 = vshrl.u32 %v738, 7
      %v740 = vsub.s32 %v352, %v739
      %v741 = vrot.slane %v703, %v740
      %v742 = vlaneseq
      %v743 = vshrl.u32 %v742, 7
      %v744 = vsub.s32 %v352, %v743
      %v745 = vrot.slane %v706, %v744
      %v746 = vlaneseq
      %v747 = vshrl.u32 %v746, 7
      %v748 = vsub.s32 %v352, %v747
      %v749 = vrot.slane %v709, %v748
      %vm750 = vcmask 1041409
      %v751 = vsel %vm750, %v725, %v721
      %vm752 = vcmask 1042434
      %v753 = vsel %vm752, %v729, %v751
      %vm754 = vcmask 1043459
      %v755 = vsel %vm754, %v733, %v753
      %vm756 = vcmask 1044484
      %v757 = vsel %vm756, %v737, %v755
      %vm758 = vcmask 1045509
      %v759 = vsel %vm758, %v741, %v757
      %vm760 = vcmask 1046534
      %v761 = vsel %vm760, %v745, %v759
      %vm762 = vcmask 1047559
      %v763 = vsel %vm762, %v749, %v761
      %v765 = vsel %vm433, %v763, -1e+30
      %vm766 = vcmask 64512
      %v767 = vsel %vm766, %v765, -inf
      %768 = vmax.xlane.f32.xlu0 %v767
      %v769 = vpop.xlane.xlu0 %768
      %v770 = vsub.f32 %v765, %v769
      %v771 = vmul.f32 %v770, 1.442695
      %v772 = vpow.pop %v771
      %v773 = vsel %vm433, %v772, 0.0
      %v774 = vsel %vm766, %v773, 0.0
      %775 = vadd.xlane.f32.xlu0 %v774
      %v776 = vpop.xlane.xlu0 %775
      %v777 = vrcp.pop %v776
      %v778 = vmul.f32 %v773, %v777
      %v779 = vlaneseq
      %v780 = vshrl.u32 %v779, 7
      %v781 = vsub.s32 1, %v780
      %v782 = vrot.slane %v268, %v781
      %v784 = vsel %vm766, %v778, 0
      %786 = vmatprep.subr.mxu0 0.0
      %787 = vmatpush1.msra.mxu0 %v509
      %788 = vmatprep.subr.mxu0 0.0
      %789 = vmatpush1.msra.mxu0 0.0
      %790 = vmatprep.subr.mxu0 0.0
      %791 = vmatpush1.msra.mxu0 0.0
      %792 = vmatprep.subr.mxu0 0.0
      %793 = vmatpush1.msra.mxu0 0.0
      %794 = vmatprep.subr.mxu0 0.0
      %795 = vmatpush1.msra.mxu0 0.0
      %796 = vmatprep.subr.mxu0 0.0
      %797 = vmatpush1.msra.mxu0 0.0
      %798 = vmatprep.subr.mxu0 0.0
      %799 = vmatpush1.msra.mxu0 0.0
      %800 = vmatprep.subr.mxu0 0.0
      %801 = vmatpush1.msra.mxu0 0.0
      %802 = vmatprep.subr.mxu0 0.0
      %803 = vmatpush1.msra.mxu0 0.0
      %804 = vmatprep.subr.mxu0 0.0
      %805 = vmatpush1.msra.mxu0 0.0
      %806 = vmatprep.subr.mxu0 0.0
      %807 = vmatpush1.msra.mxu0 0.0
      %808 = vmatprep.subr.mxu0 0.0
      %809 = vmatpush1.msra.mxu0 0.0
      %810 = vmatprep.subr.mxu0 0.0
      %811 = vmatpush1.msra.mxu0 0.0
      %812 = vmatprep.subr.mxu0 0.0
      %813 = vmatpush1.msra.mxu0 0.0
      %814 = vmatprep.subr.mxu0 0.0
      %815 = vmatpush1.msra.mxu0 0.0
      %816 = vmatprep.subr.mxu0 0.0
      %817 = vmatpush1.msra.mxu0 0.0
      %818 = vmatprep.subr.mxu0 0.0
      %819 = vmatpush1.msra.mxu0 0.0
      %820 = vmatprep.subr.mxu0 0.0
      %821 = vmatpush1.msra.mxu0 0.0
      %822 = vmatprep.subr.mxu0 0.0
      %823 = vmatpush1.msra.mxu0 0.0
      %824 = vmatprep.subr.mxu0 0.0
      %825 = vmatpush1.msra.mxu0 0.0
      %826 = vmatprep.subr.mxu0 0.0
      %827 = vmatpush1.msra.mxu0 0.0
      %828 = vmatprep.subr.mxu0 0.0
      %829 = vmatpush1.msra.mxu0 0.0
      %830 = vmatprep.subr.mxu0 0.0
      %831 = vmatpush1.msra.mxu0 0.0
      %832 = vmatprep.subr.mxu0 0.0
      %833 = vmatpush1.msra.mxu0 0.0
      %834 = vmatprep.subr.mxu0 0.0
      %835 = vmatpush1.msra.mxu0 0.0
      %836 = vmatprep.subr.mxu0 0.0
      %837 = vmatpush1.msra.mxu0 0.0
      %838 = vmatprep.subr.mxu0 0.0
      %839 = vmatpush1.msra.mxu0 0.0
      %840 = vmatprep.subr.mxu0 0.0
      %841 = vmatpush1.msra.mxu0 0.0
      %842 = vmatprep.subr.mxu0 0.0
      %843 = vmatpush1.msra.mxu0 0.0
      %844 = vmatprep.subr.mxu0 0.0
      %845 = vmatpush1.msra.mxu0 0.0
      %846 = vmatprep.subr.mxu0 0.0
      %847 = vmatpush1.msra.mxu0 0.0
      %848 = vmatprep.subr.mxu0 0.0
      %849 = vmatpush1.msra.mxu0 0.0
      %850 = vmatprep.mubr.f32.mxu0 0.0
      %851 = vmatmul.mubr.f32.gmra.mrb[0].mxu0 %v784
      %v852 = vpop.f32.mrb[0].mxu0
      %v853 = vadd.f32 %v782, %v852
      %v854 = vpop.f32.mrb[0].mxu0
      %855 = vdwg.mxu0
      %v856 = vmax.f32 %v853, 0.0
      %v857 = vlaneseq
      %v858 = vshrl.u32 %v857, 7
      %v859 = vsub.s32 2, %v858
      %v860 = vrot.slane %v268, %v859
      %v862 = vsel %vm685, %v856, 0
      %864 = vmatprep.subr.mxu0 0.0
      %865 = vmatpush1.msra.mxu0 %v275
      %866 = vmatprep.subr.mxu0 0.0
      %867 = vmatpush1.msra.mxu0 %v276
      %868 = vmatprep.subr.mxu0 0.0
      %869 = vmatpush1.msra.mxu0 %v277
      %870 = vmatprep.subr.mxu0 0.0
      %871 = vmatpush1.msra.mxu0 %v278
      %872 = vmatprep.subr.mxu0 0.0
      %873 = vmatpush1.msra.mxu0 %v279
      %874 = vmatprep.subr.mxu0 0.0
      %875 = vmatpush1.msra.mxu0 %v280
      %876 = vmatprep.subr.mxu0 0.0
      %877 = vmatpush1.msra.mxu0 %v281
      %878 = vmatprep.subr.mxu0 0.0
      %879 = vmatpush1.msra.mxu0 %v282
      %880 = vmatprep.subr.mxu0 0.0
      %881 = vmatpush1.msra.mxu0 0.0
      %882 = vmatprep.subr.mxu0 0.0
      %883 = vmatpush1.msra.mxu0 0.0
      %884 = vmatprep.subr.mxu0 0.0
      %885 = vmatpush1.msra.mxu0 0.0
      %886 = vmatprep.subr.mxu0 0.0
      %887 = vmatpush1.msra.mxu0 0.0
      %888 = vmatprep.subr.mxu0 0.0
      %889 = vmatpush1.msra.mxu0 0.0
      %890 = vmatprep.subr.mxu0 0.0
      %891 = vmatpush1.msra.mxu0 0.0
      %892 = vmatprep.subr.mxu0 0.0
      %893 = vmatpush1.msra.mxu0 0.0
      %894 = vmatprep.subr.mxu0 0.0
      %895 = vmatpush1.msra.mxu0 0.0
      %896 = vmatprep.subr.mxu0 0.0
      %897 = vmatpush1.msra.mxu0 0.0
      %898 = vmatprep.subr.mxu0 0.0
      %899 = vmatpush1.msra.mxu0 0.0
      %900 = vmatprep.subr.mxu0 0.0
      %901 = vmatpush1.msra.mxu0 0.0
      %902 = vmatprep.subr.mxu0 0.0
      %903 = vmatpush1.msra.mxu0 0.0
      %904 = vmatprep.subr.mxu0 0.0
      %905 = vmatpush1.msra.mxu0 0.0
      %906 = vmatprep.subr.mxu0 0.0
      %907 = vmatpush1.msra.mxu0 0.0
      %908 = vmatprep.subr.mxu0 0.0
      %909 = vmatpush1.msra.mxu0 0.0
      %910 = vmatprep.subr.mxu0 0.0
      %911 = vmatpush1.msra.mxu0 0.0
      %912 = vmatprep.subr.mxu0 0.0
      %913 = vmatpush1.msra.mxu0 0.0
      %914 = vmatprep.subr.mxu0 0.0
      %915 = vmatpush1.msra.mxu0 0.0
      %916 = vmatprep.subr.mxu0 0.0
      %917 = vmatpush1.msra.mxu0 0.0
      %918 = vmatprep.subr.mxu0 0.0
      %919 = vmatpush1.msra.mxu0 0.0
      %920 = vmatprep.subr.mxu0 0.0
      %921 = vmatpush1.msra.mxu0 0.0
      %922 = vmatprep.subr.mxu0 0.0
      %923 = vmatpush1.msra.mxu0 0.0
      %924 = vmatprep.subr.mxu0 0.0
      %925 = vmatpush1.msra.mxu0 0.0
      %926 = vmatprep.subr.mxu0 0.0
      %927 = vmatpush1.msra.mxu0 0.0
      %928 = vmatprep.mubr.f32.mxu0 0.0
      %929 = vmatmul.mubr.f32.gmra.mrb[0].mxu0 %v862
      %v930 = vpop.f32.mrb[0].mxu0
      %v931 = vadd.f32 %v860, %v930
      %v932 = vpop.f32.mrb[0].mxu0
      %933 = vdwg.mxu0
      %v935 = vcombine.high %v931, %v931
      %v937 = vunpack.c.l.s4 1966171168
      %v938 = vunpack.c.0.s8 %v937
      %v939 = vlaneseq
      %v940 = vshrl.u32 %v939, 7
      %v941 = vsub.s32 %v938, %v940
      %v942 = vrot.slane %v931, %v941
      %v944 = vunpack.c.l.s4 1966171168
      %v945 = vunpack.c.0.s8 %v944
      %v946 = vlaneseq
      %v947 = vshrl.u32 %v946, 7
      %v948 = vsub.s32 %v945, %v947
      %v949 = vrot.slane %v935, %v948
      %v950 = vcombine.high %v942, %v942
      %v951 = vcombine.high %v949, %v949
      %v953 = vunpack.c.l.s4 1966171168
      %v954 = vunpack.c.0.s8 %v953
      %v955 = vlaneseq
      %v956 = vshrl.u32 %v955, 7
      %v957 = vsub.s32 %v954, %v956
      %v958 = vrot.slane %v942, %v957
      %v960 = vunpack.c.l.s4 1966171168
      %v961 = vunpack.c.0.s8 %v960
      %v962 = vlaneseq
      %v963 = vshrl.u32 %v962, 7
      %v964 = vsub.s32 %v961, %v963
      %v965 = vrot.slane %v949, %v964
      %v967 = vunpack.c.l.s4 1966171168
      %v968 = vunpack.c.0.s8 %v967
      %v969 = vlaneseq
      %v970 = vshrl.u32 %v969, 7
      %v971 = vsub.s32 %v968, %v970
      %v972 = vrot.slane %v950, %v971
      %v974 = vunpack.c.l.s4 1966171168
      %v975 = vunpack.c.0.s8 %v974
      %v976 = vlaneseq
      %v977 = vshrl.u32 %v976, 7
      %v978 = vsub.s32 %v975, %v977
      %v979 = vrot.slane %v951, %v978
      %v980 = vcombine.high %v958, %v958
      %v981 = vcombine.high %v965, %v965
      %v982 = vcombine.high %v972, %v972
      %v983 = vcombine.high %v979, %v979
      %v984 = vlaneseq
      %v985 = vshrl.u32 %v984, 7
      %v986 = vsub.s32 0, %v985
      %v987 = vrot.slane %v958, %v986
      %v988 = vlaneseq
      %v989 = vshrl.u32 %v988, 7
      %v990 = vsub.s32 0, %v989
      %v991 = vrot.slane %v972, %v990
      %v992 = vlaneseq
      %v993 = vshrl.u32 %v992, 7
      %v994 = vsub.s32 0, %v993
      %v995 = vrot.slane %v980, %v994
      %v996 = vlaneseq
      %v997 = vshrl.u32 %v996, 7
      %v998 = vsub.s32 0, %v997
      %v999 = vrot.slane %v982, %v998
      %v1000 = vlaneseq
      %v1001 = vshrl.u32 %v1000, 7
      %v1002 = vsub.s32 0, %v1001
      %v1003 = vrot.slane %v965, %v1002
      %v1004 = vlaneseq
      %v1005 = vshrl.u32 %v1004, 7
      %v1006 = vsub.s32 0, %v1005
      %v1007 = vrot.slane %v979, %v1006
      %v1008 = vlaneseq
      %v1009 = vshrl.u32 %v1008, 7
      %v1010 = vsub.s32 0, %v1009
      %v1011 = vrot.slane %v981, %v1010
      %v1012 = vlaneseq
      %v1013 = vshrl.u32 %v1012, 7
      %v1014 = vsub.s32 0, %v1013
      %v1015 = vrot.slane %v983, %v1014
      %1024 = vrot.lane.b32.xlu0 %v931, 64
      %v1025 = vpop.permute.xlu0 %1024
      %v1027 = vadd.f32 %v987, %v1025
      %v1028 = vadd.f32 %v991, %v1025
      %v1029 = vadd.f32 %v995, %v1025
      %v1030 = vadd.f32 %v999, %v1025
      %v1031 = vadd.f32 %v1003, %v1025
      %v1032 = vadd.f32 %v1007, %v1025
      %v1033 = vadd.f32 %v1011, %v1025
      %v1034 = vadd.f32 %v1015, %v1025
      %vm1035 = vcmp.gt.f32.partialorder %v1027, 0.0
      %vm1036 = vcmp.gt.f32.partialorder %v1028, 0.0
      %vm1037 = vcmp.gt.f32.partialorder %v1029, 0.0
      %vm1038 = vcmp.gt.f32.partialorder %v1030, 0.0
      %vm1039 = vcmp.gt.f32.partialorder %v1031, 0.0
      %vm1040 = vcmp.gt.f32.partialorder %v1032, 0.0
      %vm1041 = vcmp.gt.f32.partialorder %v1033, 0.0
      %vm1042 = vcmp.gt.f32.partialorder %v1034, 0.0
      %v1043 = vmul.f32 %v1027, 0.2
      %v1044 = vmul.f32 %v1028, 0.2
      %v1045 = vmul.f32 %v1029, 0.2
      %v1046 = vmul.f32 %v1030, 0.2
      %v1047 = vmul.f32 %v1031, 0.2
      %v1048 = vmul.f32 %v1032, 0.2
      %v1049 = vmul.f32 %v1033, 0.2
      %v1050 = vmul.f32 %v1034, 0.2
      %v1051 = vsel %vm1035, %v1027, %v1043
      %v1052 = vsel %vm1036, %v1028, %v1044
      %v1053 = vsel %vm1037, %v1029, %v1045
      %v1054 = vsel %vm1038, %v1030, %v1046
      %v1055 = vsel %vm1039, %v1031, %v1047
      %v1056 = vsel %vm1040, %v1032, %v1048
      %v1057 = vsel %vm1041, %v1033, %v1049
      %v1058 = vsel %vm1042, %v1034, %v1050
      %v1059 = vlaneseq
      %v1060 = vshrl.u32 %v1059, 7
      %v1061 = vsub.s32 5, %v1060
      %v1062 = vrot.slane %v270, %v1061
      %1064 = vrot.lane.b32.xlu0 %v1062, 64
      %v1065 = vpop.permute.xlu0 %1064
      %v1067 = vmul.f32 %v1051, %v1065
      %v1068 = vmul.f32 %v1052, %v1065
      %v1069 = vmul.f32 %v1053, %v1065
      %v1070 = vmul.f32 %v1054, %v1065
      %v1071 = vmul.f32 %v1055, %v1065
      %v1072 = vmul.f32 %v1056, %v1065
      %v1073 = vmul.f32 %v1057, %v1065
      %v1074 = vmul.f32 %v1058, %v1065
      %1083 = vrot.lane.b32.xlu0 %v1067, 64
      %v1084 = vpop.permute.xlu0 %1083
      %1085 = vrot.lane.b32.xlu0 %v1068, 64
      %v1086 = vpop.permute.xlu0 %1085
      %1087 = vrot.lane.b32.xlu0 %v1069, 64
      %v1088 = vpop.permute.xlu0 %1087
      %1089 = vrot.lane.b32.xlu0 %v1070, 64
      %v1090 = vpop.permute.xlu0 %1089
      %1091 = vrot.lane.b32.xlu0 %v1071, 64
      %v1092 = vpop.permute.xlu0 %1091
      %1093 = vrot.lane.b32.xlu0 %v1072, 64
      %v1094 = vpop.permute.xlu0 %1093
      %1095 = vrot.lane.b32.xlu0 %v1073, 64
      %v1096 = vpop.permute.xlu0 %1095
      %1097 = vrot.lane.b32.xlu0 %v1074, 64
      %v1098 = vpop.permute.xlu0 %1097
      %v1107 = vsel %vm685, %v1084, 0.0
      %1108 = vadd.xlane.f32.xlu0 %v1107
      %v1109 = vpop.xlane.xlu0 %1108
      %v1110 = vsel %vm685, %v1086, 0.0
      %1111 = vadd.xlane.f32.xlu0 %v1110
      %v1112 = vpop.xlane.xlu0 %1111
      %v1113 = vsel %vm685, %v1088, 0.0
      %1114 = vadd.xlane.f32.xlu0 %v1113
      %v1115 = vpop.xlane.xlu0 %1114
      %v1116 = vsel %vm685, %v1090, 0.0
      %1117 = vadd.xlane.f32.xlu0 %v1116
      %v1118 = vpop.xlane.xlu0 %1117
      %v1119 = vsel %vm685, %v1092, 0.0
      %1120 = vadd.xlane.f32.xlu0 %v1119
      %v1121 = vpop.xlane.xlu0 %1120
      %v1122 = vsel %vm685, %v1094, 0.0
      %1123 = vadd.xlane.f32.xlu0 %v1122
      %v1124 = vpop.xlane.xlu0 %1123
      %v1125 = vsel %vm685, %v1096, 0.0
      %1126 = vadd.xlane.f32.xlu0 %v1125
      %v1127 = vpop.xlane.xlu0 %1126
      %v1128 = vsel %vm685, %v1098, 0.0
      %1129 = vadd.xlane.f32.xlu0 %v1128
      %v1130 = vpop.xlane.xlu0 %1129
      %v1139 = vlaneseq
      %v1140 = vshrl.u32 %v1139, 7
      %v1141 = vsub.s32 %v352, %v1140
      %v1142 = vrot.slane %v1109, %v1141
      %v1143 = vlaneseq
      %v1144 = vshrl.u32 %v1143, 7
      %v1145 = vsub.s32 %v352, %v1144
      %v1146 = vrot.slane %v1112, %v1145
      %v1147 = vlaneseq
      %v1148 = vshrl.u32 %v1147, 7
      %v1149 = vsub.s32 %v352, %v1148
      %v1150 = vrot.slane %v1115, %v1149
      %v1151 = vlaneseq
      %v1152 = vshrl.u32 %v1151, 7
      %v1153 = vsub.s32 %v352, %v1152
      %v1154 = vrot.slane %v1118, %v1153
      %v1155 = vlaneseq
      %v1156 = vshrl.u32 %v1155, 7
      %v1157 = vsub.s32 %v352, %v1156
      %v1158 = vrot.slane %v1121, %v1157
      %v1159 = vlaneseq
      %v1160 = vshrl.u32 %v1159, 7
      %v1161 = vsub.s32 %v352, %v1160
      %v1162 = vrot.slane %v1124, %v1161
      %v1163 = vlaneseq
      %v1164 = vshrl.u32 %v1163, 7
      %v1165 = vsub.s32 %v352, %v1164
      %v1166 = vrot.slane %v1127, %v1165
      %v1167 = vlaneseq
      %v1168 = vshrl.u32 %v1167, 7
      %v1169 = vsub.s32 %v352, %v1168
      %v1170 = vrot.slane %v1130, %v1169
      %v1171 = vsel %vm750, %v1146, %v1142
      %v1172 = vsel %vm752, %v1150, %v1171
      %v1173 = vsel %vm754, %v1154, %v1172
      %v1174 = vsel %vm756, %v1158, %v1173
      %v1175 = vsel %vm758, %v1162, %v1174
      %v1176 = vsel %vm760, %v1166, %v1175
      %v1177 = vsel %vm762, %v1170, %v1176
      %v1179 = vsel %vm433, %v1177, -1e+30
      %v1180 = vsel %vm766, %v1179, -inf
      %1181 = vmax.xlane.f32.xlu0 %v1180
      %v1182 = vpop.xlane.xlu0 %1181
      %v1183 = vsub.f32 %v1179, %v1182
      %v1184 = vmul.f32 %v1183, 1.442695
      %v1185 = vpow.pop %v1184
      %v1186 = vsel %vm433, %v1185, 0.0
      %v1187 = vsel %vm766, %v1186, 0.0
      %1188 = vadd.xlane.f32.xlu0 %v1187
      %v1189 = vpop.xlane.xlu0 %1188
      %v1190 = vrcp.pop %v1189
      %v1191 = vmul.f32 %v1186, %v1190
      %v1192 = vlaneseq
      %v1193 = vshrl.u32 %v1192, 7
      %v1194 = vsub.s32 3, %v1193
      %v1195 = vrot.slane %v268, %v1194
      %v1197 = vsel %vm766, %v1191, 0
      %1199 = vmatprep.subr.mxu0 0.0
      %1200 = vmatpush1.msra.mxu0 %v931
      %1201 = vmatprep.subr.mxu0 0.0
      %1202 = vmatpush1.msra.mxu0 0.0
      %1203 = vmatprep.subr.mxu0 0.0
      %1204 = vmatpush1.msra.mxu0 0.0
      %1205 = vmatprep.subr.mxu0 0.0
      %1206 = vmatpush1.msra.mxu0 0.0
      %1207 = vmatprep.subr.mxu0 0.0
      %1208 = vmatpush1.msra.mxu0 0.0
      %1209 = vmatprep.subr.mxu0 0.0
      %1210 = vmatpush1.msra.mxu0 0.0
      %1211 = vmatprep.subr.mxu0 0.0
      %1212 = vmatpush1.msra.mxu0 0.0
      %1213 = vmatprep.subr.mxu0 0.0
      %1214 = vmatpush1.msra.mxu0 0.0
      %1215 = vmatprep.subr.mxu0 0.0
      %1216 = vmatpush1.msra.mxu0 0.0
      %1217 = vmatprep.subr.mxu0 0.0
      %1218 = vmatpush1.msra.mxu0 0.0
      %1219 = vmatprep.subr.mxu0 0.0
      %1220 = vmatpush1.msra.mxu0 0.0
      %1221 = vmatprep.subr.mxu0 0.0
      %1222 = vmatpush1.msra.mxu0 0.0
      %1223 = vmatprep.subr.mxu0 0.0
      %1224 = vmatpush1.msra.mxu0 0.0
      %1225 = vmatprep.subr.mxu0 0.0
      %1226 = vmatpush1.msra.mxu0 0.0
      %1227 = vmatprep.subr.mxu0 0.0
      %1228 = vmatpush1.msra.mxu0 0.0
      %1229 = vmatprep.subr.mxu0 0.0
      %1230 = vmatpush1.msra.mxu0 0.0
      %1231 = vmatprep.subr.mxu0 0.0
      %1232 = vmatpush1.msra.mxu0 0.0
      %1233 = vmatprep.subr.mxu0 0.0
      %1234 = vmatpush1.msra.mxu0 0.0
      %1235 = vmatprep.subr.mxu0 0.0
      %1236 = vmatpush1.msra.mxu0 0.0
      %1237 = vmatprep.subr.mxu0 0.0
      %1238 = vmatpush1.msra.mxu0 0.0
      %1239 = vmatprep.subr.mxu0 0.0
      %1240 = vmatpush1.msra.mxu0 0.0
      %1241 = vmatprep.subr.mxu0 0.0
      %1242 = vmatpush1.msra.mxu0 0.0
      %1243 = vmatprep.subr.mxu0 0.0
      %1244 = vmatpush1.msra.mxu0 0.0
      %1245 = vmatprep.subr.mxu0 0.0
      %1246 = vmatpush1.msra.mxu0 0.0
      %1247 = vmatprep.subr.mxu0 0.0
      %1248 = vmatpush1.msra.mxu0 0.0
      %1249 = vmatprep.subr.mxu0 0.0
      %1250 = vmatpush1.msra.mxu0 0.0
      %1251 = vmatprep.subr.mxu0 0.0
      %1252 = vmatpush1.msra.mxu0 0.0
      %1253 = vmatprep.subr.mxu0 0.0
      %1254 = vmatpush1.msra.mxu0 0.0
      %1255 = vmatprep.subr.mxu0 0.0
      %1256 = vmatpush1.msra.mxu0 0.0
      %1257 = vmatprep.subr.mxu0 0.0
      %1258 = vmatpush1.msra.mxu0 0.0
      %1259 = vmatprep.subr.mxu0 0.0
      %1260 = vmatpush1.msra.mxu0 0.0
      %1261 = vmatprep.subr.mxu0 0.0
      %1262 = vmatpush1.msra.mxu0 0.0
      %1263 = vmatprep.mubr.f32.mxu0 0.0
      %1264 = vmatmul.mubr.f32.gmra.mrb[0].mxu0 %v1197
      %v1265 = vpop.f32.mrb[0].mxu0
      %v1266 = vadd.f32 %v1195, %v1265
      %v1267 = vpop.f32.mrb[0].mxu0
      %1268 = vdwg.mxu0
      %v1269 = vmax.f32 %v1266, 0.0
      %v1270 = vsel %vm685, %v1269, 0.0
      %v1271 = vrot.slane %v1270, 4
      %v1272 = vadd.f32 %v1270, %v1271
      %v1273 = vrot.slane %v1272, 2
      %v1274 = vadd.f32 %v1272, %v1273
      %v1275 = vrot.slane %v1274, 1
      %v1276 = vadd.f32 %v1274, %v1275
      %v1277 = vrcp.pop 8.0
      %v1278 = vmul.f32 %v1276, %v1277
      %v1279 = vlaneseq
      %v1280 = vshrl.u32 %v1279, 7
      %v1281 = vsub.s32 4, %v1280
      %v1282 = vrot.slane %v268, %v1281
      %v1284 = vsel %vm685, %v1269, 0
      %v1287 = vsel %vm685, %v1278, 0
      %1289 = vmatprep.subr.mxu0 0.0
      %1290 = vmatpush1.msra.mxu0 %v283
      %1291 = vmatprep.subr.mxu0 0.0
      %1292 = vmatpush1.msra.mxu0 %v284
      %1293 = vmatprep.subr.mxu0 0.0
      %1294 = vmatpush1.msra.mxu0 %v285
      %1295 = vmatprep.subr.mxu0 0.0
      %1296 = vmatpush1.msra.mxu0 %v286
      %1297 = vmatprep.subr.mxu0 0.0
      %1298 = vmatpush1.msra.mxu0 %v287
      %1299 = vmatprep.subr.mxu0 0.0
      %1300 = vmatpush1.msra.mxu0 %v288
      %1301 = vmatprep.subr.mxu0 0.0
      %1302 = vmatpush1.msra.mxu0 %v289
      %1303 = vmatprep.subr.mxu0 0.0
      %1304 = vmatpush1.msra.mxu0 %v290
      %1305 = vmatprep.subr.mxu0 0.0
      %1306 = vmatpush1.msra.mxu0 0.0
      %1307 = vmatprep.subr.mxu0 0.0
      %1308 = vmatpush1.msra.mxu0 0.0
      %1309 = vmatprep.subr.mxu0 0.0
      %1310 = vmatpush1.msra.mxu0 0.0
      %1311 = vmatprep.subr.mxu0 0.0
      %1312 = vmatpush1.msra.mxu0 0.0
      %1313 = vmatprep.subr.mxu0 0.0
      %1314 = vmatpush1.msra.mxu0 0.0
      %1315 = vmatprep.subr.mxu0 0.0
      %1316 = vmatpush1.msra.mxu0 0.0
      %1317 = vmatprep.subr.mxu0 0.0
      %1318 = vmatpush1.msra.mxu0 0.0
      %1319 = vmatprep.subr.mxu0 0.0
      %1320 = vmatpush1.msra.mxu0 0.0
      %1321 = vmatprep.subr.mxu0 0.0
      %1322 = vmatpush1.msra.mxu0 0.0
      %1323 = vmatprep.subr.mxu0 0.0
      %1324 = vmatpush1.msra.mxu0 0.0
      %1325 = vmatprep.subr.mxu0 0.0
      %1326 = vmatpush1.msra.mxu0 0.0
      %1327 = vmatprep.subr.mxu0 0.0
      %1328 = vmatpush1.msra.mxu0 0.0
      %1329 = vmatprep.subr.mxu0 0.0
      %1330 = vmatpush1.msra.mxu0 0.0
      %1331 = vmatprep.subr.mxu0 0.0
      %1332 = vmatpush1.msra.mxu0 0.0
      %1333 = vmatprep.subr.mxu0 0.0
      %1334 = vmatpush1.msra.mxu0 0.0
      %1335 = vmatprep.subr.mxu0 0.0
      %1336 = vmatpush1.msra.mxu0 0.0
      %1337 = vmatprep.subr.mxu0 0.0
      %1338 = vmatpush1.msra.mxu0 0.0
      %1339 = vmatprep.subr.mxu0 0.0
      %1340 = vmatpush1.msra.mxu0 0.0
      %1341 = vmatprep.subr.mxu0 0.0
      %1342 = vmatpush1.msra.mxu0 0.0
      %1343 = vmatprep.subr.mxu0 0.0
      %1344 = vmatpush1.msra.mxu0 0.0
      %1345 = vmatprep.subr.mxu0 0.0
      %1346 = vmatpush1.msra.mxu0 0.0
      %1347 = vmatprep.subr.mxu0 0.0
      %1348 = vmatpush1.msra.mxu0 0.0
      %1349 = vmatprep.subr.mxu0 0.0
      %1350 = vmatpush1.msra.mxu0 0.0
      %1351 = vmatprep.subr.mxu0 0.0
      %1352 = vmatpush1.msra.mxu0 0.0
      %1353 = vmatprep.mubr.f32.mxu0 0.0
      %1354 = vmatmul.mubr.f32.gmra.mrb[0].mxu0 %v1284
      %v1355 = vpop.f32.mrb[0].mxu0
      %v1356 = vadd.f32 %v1282, %v1355
      %v1357 = vpop.f32.mrb[0].mxu0
      %1358 = vmatprep.mubr.f32.mxu0 0.0
      %1359 = vmatmul.mubr.f32.gmra.mrb[0].mxu0 %v1287
      %v1360 = vpop.f32.mrb[0].mxu0
      %v1361 = vadd.f32 %v1282, %v1360
      %v1362 = vpop.f32.mrb[0].mxu0
      %1363 = vdwg.mxu0
      %v1364 = vmul.f32 %v1356, 0.5
      %v1365 = vmul.f32 %v1364, 1.442695
      %v1366 = vpow.pop %v1365
      %v1367 = vmul.f32 %v266, %v1366
      %1369 = vrot.lane.b32.xlu0 %v1367, 96
      %v1370 = vpop.permute.xlu0 %1369
      %v1372 = vadd.f32 %v1356, %v1370
      %v1373 = vlaneseq
      %v1374 = vshrl.u32 %v1373, 7
      %v1375 = vsub.s32 5, %v1374
      %v1376 = vrot.slane %v268, %v1375
      %v1378 = vsel %vm438, %v1372, 0
      %1380 = vmatprep.subr.mxu0 0.0
      %1381 = vmatpush1.msra.mxu0 %v295
      %1382 = vmatprep.subr.mxu0 0.0
      %1383 = vmatpush1.msra.mxu0 %v296
      %1384 = vmatprep.subr.mxu0 0.0
      %1385 = vmatpush1.msra.mxu0 %v297
      %1386 = vmatprep.subr.mxu0 0.0
      %1387 = vmatpush1.msra.mxu0 %v298
      %1388 = vmatprep.subr.mxu0 0.0
      %1389 = vmatpush1.msra.mxu0 0.0
      %1390 = vmatprep.subr.mxu0 0.0
      %1391 = vmatpush1.msra.mxu0 0.0
      %1392 = vmatprep.subr.mxu0 0.0
      %1393 = vmatpush1.msra.mxu0 0.0
      %1394 = vmatprep.subr.mxu0 0.0
      %1395 = vmatpush1.msra.mxu0 0.0
      %1396 = vmatprep.subr.mxu0 0.0
      %1397 = vmatpush1.msra.mxu0 0.0
      %1398 = vmatprep.subr.mxu0 0.0
      %1399 = vmatpush1.msra.mxu0 0.0
      %1400 = vmatprep.subr.mxu0 0.0
      %1401 = vmatpush1.msra.mxu0 0.0
      %1402 = vmatprep.subr.mxu0 0.0
      %1403 = vmatpush1.msra.mxu0 0.0
      %1404 = vmatprep.subr.mxu0 0.0
      %1405 = vmatpush1.msra.mxu0 0.0
      %1406 = vmatprep.subr.mxu0 0.0
      %1407 = vmatpush1.msra.mxu0 0.0
      %1408 = vmatprep.subr.mxu0 0.0
      %1409 = vmatpush1.msra.mxu0 0.0
      %1410 = vmatprep.subr.mxu0 0.0
      %1411 = vmatpush1.msra.mxu0 0.0
      %1412 = vmatprep.subr.mxu0 0.0
      %1413 = vmatpush1.msra.mxu0 0.0
      %1414 = vmatprep.subr.mxu0 0.0
      %1415 = vmatpush1.msra.mxu0 0.0
      %1416 = vmatprep.subr.mxu0 0.0
      %1417 = vmatpush1.msra.mxu0 0.0
      %1418 = vmatprep.subr.mxu0 0.0
      %1419 = vmatpush1.msra.mxu0 0.0
      %1420 = vmatprep.subr.mxu0 0.0
      %1421 = vmatpush1.msra.mxu0 0.0
      %1422 = vmatprep.subr.mxu0 0.0
      %1423 = vmatpush1.msra.mxu0 0.0
      %1424 = vmatprep.subr.mxu0 0.0
      %1425 = vmatpush1.msra.mxu0 0.0
      %1426 = vmatprep.subr.mxu0 0.0
      %1427 = vmatpush1.msra.mxu0 0.0
      %1428 = vmatprep.subr.mxu0 0.0
      %1429 = vmatpush1.msra.mxu0 0.0
      %1430 = vmatprep.subr.mxu0 0.0
      %1431 = vmatpush1.msra.mxu0 0.0
      %1432 = vmatprep.subr.mxu0 0.0
      %1433 = vmatpush1.msra.mxu0 0.0
      %1434 = vmatprep.subr.mxu0 0.0
      %1435 = vmatpush1.msra.mxu0 0.0
      %1436 = vmatprep.subr.mxu0 0.0
      %1437 = vmatpush1.msra.mxu0 0.0
      %1438 = vmatprep.subr.mxu0 0.0
      %1439 = vmatpush1.msra.mxu0 0.0
      %1440 = vmatprep.subr.mxu0 0.0
      %1441 = vmatpush1.msra.mxu0 0.0
      %1442 = vmatprep.subr.mxu0 0.0
      %1443 = vmatpush1.msra.mxu0 0.0
      %1444 = vmatprep.mubr.f32.mxu0 0.0
      %1445 = vmatmul.mubr.f32.gmra.mrb[0].mxu0 %v1378
      %v1446 = vpop.f32.mrb[0].mxu0
      %v1447 = vadd.f32 %v1376, %v1446
      %v1448 = vpop.f32.mrb[0].mxu0
      %1449 = vdwg.mxu0
      %v1450 = vmax.f32 %v1447, 0.0
      %v1451 = vsel %vm685, %v1450, 0.0
      %1452 = vadd.xlane.f32.xlu0 %v1451
      %v1453 = vpop.xlane.xlu0 %1452
      %v1454 = vrcp.pop 64.0
      %v1455 = vmul.f32 %v1453, %v1454
      %v1456 = vsub.f32 %v1450, %v1455
      %v1457 = vmul.f32 %v1456, %v1456
      %v1458 = vsel %vm685, %v1457, 0.0
      %1459 = vadd.xlane.f32.xlu0 %v1458
      %v1460 = vpop.xlane.xlu0 %1459
      %v1461 = vmul.f32 %v1460, %v1454
      %v1462 = vadd.f32 %v1461, 1e-05
      %v1463 = vrsqrt.pop %v1462
      %v1464 = vmul.f32 %v1456, %v1463
      %v1465 = vlaneseq
      %v1466 = vshrl.u32 %v1465, 7
      %v1467 = vsub.s32 6, %v1466
      %v1468 = vrot.slane %v268, %v1467
      %v1469 = vmul.f32 %v1464, %v1468
      %v1470 = vlaneseq
      %v1471 = vshrl.u32 %v1470, 7
      %v1472 = vsub.s32 7, %v1471
      %v1473 = vrot.slane %v268, %v1472
      %v1474 = vadd.f32 %v1469, %v1473
      %v1475 = vlaneseq
      %v1476 = vshrl.u32 %v1475, 7
      %v1477 = vsub.s32 0, %v1476
      %v1478 = vrot.slane %v269, %v1477
      %v1480 = vsel %vm685, %v1474, 0
      %1482 = vmatprep.subr.mxu0 0.0
      %1483 = vmatpush1.msra.mxu0 %v299
      %1484 = vmatprep.subr.mxu0 0.0
      %1485 = vmatpush1.msra.mxu0 %v300
      %1486 = vmatprep.subr.mxu0 0.0
      %1487 = vmatpush1.msra.mxu0 %v301
      %1488 = vmatprep.subr.mxu0 0.0
      %1489 = vmatpush1.msra.mxu0 %v302
      %1490 = vmatprep.subr.mxu0 0.0
      %1491 = vmatpush1.msra.mxu0 %v303
      %1492 = vmatprep.subr.mxu0 0.0
      %1493 = vmatpush1.msra.mxu0 %v304
      %1494 = vmatprep.subr.mxu0 0.0
      %1495 = vmatpush1.msra.mxu0 %v305
      %1496 = vmatprep.subr.mxu0 0.0
      %1497 = vmatpush1.msra.mxu0 %v306
      %1498 = vmatprep.subr.mxu0 0.0
      %1499 = vmatpush1.msra.mxu0 0.0
      %1500 = vmatprep.subr.mxu0 0.0
      %1501 = vmatpush1.msra.mxu0 0.0
      %1502 = vmatprep.subr.mxu0 0.0
      %1503 = vmatpush1.msra.mxu0 0.0
      %1504 = vmatprep.subr.mxu0 0.0
      %1505 = vmatpush1.msra.mxu0 0.0
      %1506 = vmatprep.subr.mxu0 0.0
      %1507 = vmatpush1.msra.mxu0 0.0
      %1508 = vmatprep.subr.mxu0 0.0
      %1509 = vmatpush1.msra.mxu0 0.0
      %1510 = vmatprep.subr.mxu0 0.0
      %1511 = vmatpush1.msra.mxu0 0.0
      %1512 = vmatprep.subr.mxu0 0.0
      %1513 = vmatpush1.msra.mxu0 0.0
      %1514 = vmatprep.subr.mxu0 0.0
      %1515 = vmatpush1.msra.mxu0 0.0
      %1516 = vmatprep.subr.mxu0 0.0
      %1517 = vmatpush1.msra.mxu0 0.0
      %1518 = vmatprep.subr.mxu0 0.0
      %1519 = vmatpush1.msra.mxu0 0.0
      %1520 = vmatprep.subr.mxu0 0.0
      %1521 = vmatpush1.msra.mxu0 0.0
      %1522 = vmatprep.subr.mxu0 0.0
      %1523 = vmatpush1.msra.mxu0 0.0
      %1524 = vmatprep.subr.mxu0 0.0
      %1525 = vmatpush1.msra.mxu0 0.0
      %1526 = vmatprep.subr.mxu0 0.0
      %1527 = vmatpush1.msra.mxu0 0.0
      %1528 = vmatprep.subr.mxu0 0.0
      %1529 = vmatpush1.msra.mxu0 0.0
      %1530 = vmatprep.subr.mxu0 0.0
      %1531 = vmatpush1.msra.mxu0 0.0
      %1532 = vmatprep.subr.mxu0 0.0
      %1533 = vmatpush1.msra.mxu0 0.0
      %1534 = vmatprep.subr.mxu0 0.0
      %1535 = vmatpush1.msra.mxu0 0.0
      %1536 = vmatprep.subr.mxu0 0.0
      %1537 = vmatpush1.msra.mxu0 0.0
      %1538 = vmatprep.subr.mxu0 0.0
      %1539 = vmatpush1.msra.mxu0 0.0
      %1540 = vmatprep.subr.mxu0 0.0
      %1541 = vmatpush1.msra.mxu0 0.0
      %1542 = vmatprep.subr.mxu0 0.0
      %1543 = vmatpush1.msra.mxu0 0.0
      %1544 = vmatprep.subr.mxu0 0.0
      %1545 = vmatpush1.msra.mxu0 0.0
      %1546 = vmatprep.mubr.f32.mxu0 0.0
      %1547 = vmatmul.mubr.f32.gmra.mrb[0].mxu0 %v1480
      %v1548 = vpop.f32.mrb[0].mxu0
      %v1549 = vadd.f32 %v1478, %v1548
      %v1550 = vpop.f32.mrb[0].mxu0
      %1551 = vdwg.mxu0
      %v1552 = vmax.f32 %v1549, 0.0
      %v1553 = vsel %vm685, %v1552, 0.0
      %1554 = vadd.xlane.f32.xlu0 %v1553
      %v1555 = vpop.xlane.xlu0 %1554
      %v1556 = vmul.f32 %v1555, %v1454
      %v1557 = vsub.f32 %v1552, %v1556
      %v1558 = vmul.f32 %v1557, %v1557
      %v1559 = vsel %vm685, %v1558, 0.0
      %1560 = vadd.xlane.f32.xlu0 %v1559
      %v1561 = vpop.xlane.xlu0 %1560
      %v1562 = vmul.f32 %v1561, %v1454
      %v1563 = vadd.f32 %v1562, 1e-05
      %v1564 = vrsqrt.pop %v1563
      %v1565 = vmul.f32 %v1557, %v1564
      %v1566 = vlaneseq
      %v1567 = vshrl.u32 %v1566, 7
      %v1568 = vsub.s32 1, %v1567
      %v1569 = vrot.slane %v269, %v1568
      %v1570 = vmul.f32 %v1565, %v1569
      %v1571 = vlaneseq
      %v1572 = vshrl.u32 %v1571, 7
      %v1573 = vsub.s32 2, %v1572
      %v1574 = vrot.slane %v269, %v1573
      %v1575 = vadd.f32 %v1570, %v1574
      %v1576 = vlaneseq
      %v1577 = vshrl.u32 %v1576, 7
      %v1578 = vsub.s32 3, %v1577
      %v1579 = vrot.slane %v269, %v1578
      %v1581 = vsel %vm685, %v1575, 0
      %1583 = vmatprep.subr.mxu0 0.0
      %1584 = vmatpush1.msra.mxu0 %v319
      %1585 = vmatprep.subr.mxu0 0.0
      %1586 = vmatpush1.msra.mxu0 %v320
      %1587 = vmatprep.subr.mxu0 0.0
      %1588 = vmatpush1.msra.mxu0 %v321
      %1589 = vmatprep.subr.mxu0 0.0
      %1590 = vmatpush1.msra.mxu0 %v322
      %1591 = vmatprep.subr.mxu0 0.0
      %1592 = vmatpush1.msra.mxu0 %v323
      %1593 = vmatprep.subr.mxu0 0.0
      %1594 = vmatpush1.msra.mxu0 %v324
      %1595 = vmatprep.subr.mxu0 0.0
      %1596 = vmatpush1.msra.mxu0 %v325
      %1597 = vmatprep.subr.mxu0 0.0
      %1598 = vmatpush1.msra.mxu0 %v326
      %1599 = vmatprep.subr.mxu0 0.0
      %1600 = vmatpush1.msra.mxu0 0.0
      %1601 = vmatprep.subr.mxu0 0.0
      %1602 = vmatpush1.msra.mxu0 0.0
      %1603 = vmatprep.subr.mxu0 0.0
      %1604 = vmatpush1.msra.mxu0 0.0
      %1605 = vmatprep.subr.mxu0 0.0
      %1606 = vmatpush1.msra.mxu0 0.0
      %1607 = vmatprep.subr.mxu0 0.0
      %1608 = vmatpush1.msra.mxu0 0.0
      %1609 = vmatprep.subr.mxu0 0.0
      %1610 = vmatpush1.msra.mxu0 0.0
      %1611 = vmatprep.subr.mxu0 0.0
      %1612 = vmatpush1.msra.mxu0 0.0
      %1613 = vmatprep.subr.mxu0 0.0
      %1614 = vmatpush1.msra.mxu0 0.0
      %1615 = vmatprep.subr.mxu0 0.0
      %1616 = vmatpush1.msra.mxu0 0.0
      %1617 = vmatprep.subr.mxu0 0.0
      %1618 = vmatpush1.msra.mxu0 0.0
      %1619 = vmatprep.subr.mxu0 0.0
      %1620 = vmatpush1.msra.mxu0 0.0
      %1621 = vmatprep.subr.mxu0 0.0
      %1622 = vmatpush1.msra.mxu0 0.0
      %1623 = vmatprep.subr.mxu0 0.0
      %1624 = vmatpush1.msra.mxu0 0.0
      %1625 = vmatprep.subr.mxu0 0.0
      %1626 = vmatpush1.msra.mxu0 0.0
      %1627 = vmatprep.subr.mxu0 0.0
      %1628 = vmatpush1.msra.mxu0 0.0
      %1629 = vmatprep.subr.mxu0 0.0
      %1630 = vmatpush1.msra.mxu0 0.0
      %1631 = vmatprep.subr.mxu0 0.0
      %1632 = vmatpush1.msra.mxu0 0.0
      %1633 = vmatprep.subr.mxu0 0.0
      %1634 = vmatpush1.msra.mxu0 0.0
      %1635 = vmatprep.subr.mxu0 0.0
      %1636 = vmatpush1.msra.mxu0 0.0
      %1637 = vmatprep.subr.mxu0 0.0
      %1638 = vmatpush1.msra.mxu0 0.0
      %1639 = vmatprep.subr.mxu0 0.0
      %1640 = vmatpush1.msra.mxu0 0.0
      %1641 = vmatprep.subr.mxu0 0.0
      %1642 = vmatpush1.msra.mxu0 0.0
      %1643 = vmatprep.subr.mxu0 0.0
      %1644 = vmatpush1.msra.mxu0 0.0
      %1645 = vmatprep.subr.mxu0 0.0
      %1646 = vmatpush1.msra.mxu0 0.0
      %1647 = vmatprep.mubr.f32.mxu0 0.0
      %1648 = vmatmul.mubr.f32.gmra.mrb[0].mxu0 %v1581
      %v1649 = vpop.f32.mrb[0].mxu0
      %v1650 = vadd.f32 %v1579, %v1649
      %v1651 = vpop.f32.mrb[0].mxu0
      %1652 = vdwg.mxu0
      %1653 = vrot.lane.b32.xlu0 %v1269, 32
      %v1654 = vpop.permute.xlu0 %1653
      %vm1656 = vcmask 220160
      %v1657 = vsel %vm1656, %v1650, 0.0
      %v1658 = vsel %vm438, %v1657, %v1654
      %v1659 = vlaneseq
      %v1660 = vshrl.u32 %v1659, 7
      %v1661 = vsub.s32 4, %v1660
      %v1662 = vrot.slane %v269, %v1661
      %vm1663 = vcmask 785408
      %v1665 = vsel %vm1663, %v1658, 0
      %1667 = vmatprep.subr.mxu0 0.0
      %1668 = vmatpush1.msra.mxu0 %v307
      %1669 = vmatprep.subr.mxu0 0.0
      %1670 = vmatpush1.msra.mxu0 %v308
      %1671 = vmatprep.subr.mxu0 0.0
      %1672 = vmatpush1.msra.mxu0 %v309
      %1673 = vmatprep.subr.mxu0 0.0
      %1674 = vmatpush1.msra.mxu0 %v310
      %1675 = vmatprep.subr.mxu0 0.0
      %1676 = vmatpush1.msra.mxu0 %v311
      %1677 = vmatprep.subr.mxu0 0.0
      %1678 = vmatpush1.msra.mxu0 %v312
      %1679 = vmatprep.subr.mxu0 0.0
      %1680 = vmatpush1.msra.mxu0 %v313
      %1681 = vmatprep.subr.mxu0 0.0
      %1682 = vmatpush1.msra.mxu0 %v314
      %1683 = vmatprep.subr.mxu0 0.0
      %1684 = vmatpush1.msra.mxu0 %v315
      %1685 = vmatprep.subr.mxu0 0.0
      %1686 = vmatpush1.msra.mxu0 %v316
      %1687 = vmatprep.subr.mxu0 0.0
      %1688 = vmatpush1.msra.mxu0 %v317
      %1689 = vmatprep.subr.mxu0 0.0
      %1690 = vmatpush1.msra.mxu0 %v318
      %1691 = vmatprep.subr.mxu0 0.0
      %1692 = vmatpush1.msra.mxu0 0.0
      %1693 = vmatprep.subr.mxu0 0.0
      %1694 = vmatpush1.msra.mxu0 0.0
      %1695 = vmatprep.subr.mxu0 0.0
      %1696 = vmatpush1.msra.mxu0 0.0
      %1697 = vmatprep.subr.mxu0 0.0
      %1698 = vmatpush1.msra.mxu0 0.0
      %1699 = vmatprep.subr.mxu0 0.0
      %1700 = vmatpush1.msra.mxu0 0.0
      %1701 = vmatprep.subr.mxu0 0.0
      %1702 = vmatpush1.msra.mxu0 0.0
      %1703 = vmatprep.subr.mxu0 0.0
      %1704 = vmatpush1.msra.mxu0 0.0
      %1705 = vmatprep.subr.mxu0 0.0
      %1706 = vmatpush1.msra.mxu0 0.0
      %1707 = vmatprep.subr.mxu0 0.0
      %1708 = vmatpush1.msra.mxu0 0.0
      %1709 = vmatprep.subr.mxu0 0.0
      %1710 = vmatpush1.msra.mxu0 0.0
      %1711 = vmatprep.subr.mxu0 0.0
      %1712 = vmatpush1.msra.mxu0 0.0
      %1713 = vmatprep.subr.mxu0 0.0
      %1714 = vmatpush1.msra.mxu0 0.0
      %1715 = vmatprep.subr.mxu0 0.0
      %1716 = vmatpush1.msra.mxu0 0.0
      %1717 = vmatprep.subr.mxu0 0.0
      %1718 = vmatpush1.msra.mxu0 0.0
      %1719 = vmatprep.subr.mxu0 0.0
      %1720 = vmatpush1.msra.mxu0 0.0
      %1721 = vmatprep.subr.mxu0 0.0
      %1722 = vmatpush1.msra.mxu0 0.0
      %1723 = vmatprep.subr.mxu0 0.0
      %1724 = vmatpush1.msra.mxu0 0.0
      %1725 = vmatprep.subr.mxu0 0.0
      %1726 = vmatpush1.msra.mxu0 0.0
      %1727 = vmatprep.subr.mxu0 0.0
      %1728 = vmatpush1.msra.mxu0 0.0
      %1729 = vmatprep.subr.mxu0 0.0
      %1730 = vmatpush1.msra.mxu0 0.0
      %1731 = vmatprep.mubr.f32.mxu0 0.0
      %1732 = vmatmul.mubr.f32.gmra.mrb[0].mxu0 %v1665
      %v1733 = vpop.f32.mrb[0].mxu0
      %v1734 = vadd.f32 %v1662, %v1733
      %v1735 = vpop.f32.mrb[0].mxu0
      %1736 = vdwg.mxu0
      %v1737 = vmax.f32 %v1734, 0.0
      %v1738 = vsel %vm685, %v1737, 0.0
      %1739 = vadd.xlane.f32.xlu0 %v1738
      %v1740 = vpop.xlane.xlu0 %1739
      %v1741 = vmul.f32 %v1740, %v1454
      %v1742 = vsub.f32 %v1737, %v1741
      %v1743 = vmul.f32 %v1742, %v1742
      %v1744 = vsel %vm685, %v1743, 0.0
      %1745 = vadd.xlane.f32.xlu0 %v1744
      %v1746 = vpop.xlane.xlu0 %1745
      %v1747 = vmul.f32 %v1746, %v1454
      %v1748 = vadd.f32 %v1747, 1e-05
      %v1749 = vrsqrt.pop %v1748
      %v1750 = vmul.f32 %v1742, %v1749
      %v1751 = vlaneseq
      %v1752 = vshrl.u32 %v1751, 7
      %v1753 = vsub.s32 5, %v1752
      %v1754 = vrot.slane %v269, %v1753
      %v1755 = vmul.f32 %v1750, %v1754
      %v1756 = vlaneseq
      %v1757 = vshrl.u32 %v1756, 7
      %v1758 = vsub.s32 6, %v1757
      %v1759 = vrot.slane %v269, %v1758
      %v1760 = vadd.f32 %v1755, %v1759
      %v1761 = vlaneseq
      %v1762 = vshrl.u32 %v1761, 7
      %v1763 = vsub.s32 7, %v1762
      %v1764 = vrot.slane %v269, %v1763
      %v1766 = vsel %vm685, %v1760, 0
      %1768 = vmatprep.subr.mxu0 0.0
      %1769 = vmatpush1.msra.mxu0 %v327
      %1770 = vmatprep.subr.mxu0 0.0
      %1771 = vmatpush1.msra.mxu0 %v328
      %1772 = vmatprep.subr.mxu0 0.0
      %1773 = vmatpush1.msra.mxu0 %v329
      %1774 = vmatprep.subr.mxu0 0.0
      %1775 = vmatpush1.msra.mxu0 %v330
      %1776 = vmatprep.subr.mxu0 0.0
      %1777 = vmatpush1.msra.mxu0 %v331
      %1778 = vmatprep.subr.mxu0 0.0
      %1779 = vmatpush1.msra.mxu0 %v332
      %1780 = vmatprep.subr.mxu0 0.0
      %1781 = vmatpush1.msra.mxu0 %v333
      %1782 = vmatprep.subr.mxu0 0.0
      %1783 = vmatpush1.msra.mxu0 %v334
      %1784 = vmatprep.subr.mxu0 0.0
      %1785 = vmatpush1.msra.mxu0 0.0
      %1786 = vmatprep.subr.mxu0 0.0
      %1787 = vmatpush1.msra.mxu0 0.0
      %1788 = vmatprep.subr.mxu0 0.0
      %1789 = vmatpush1.msra.mxu0 0.0
      %1790 = vmatprep.subr.mxu0 0.0
      %1791 = vmatpush1.msra.mxu0 0.0
      %1792 = vmatprep.subr.mxu0 0.0
      %1793 = vmatpush1.msra.mxu0 0.0
      %1794 = vmatprep.subr.mxu0 0.0
      %1795 = vmatpush1.msra.mxu0 0.0
      %1796 = vmatprep.subr.mxu0 0.0
      %1797 = vmatpush1.msra.mxu0 0.0
      %1798 = vmatprep.subr.mxu0 0.0
      %1799 = vmatpush1.msra.mxu0 0.0
      %1800 = vmatprep.subr.mxu0 0.0
      %1801 = vmatpush1.msra.mxu0 0.0
      %1802 = vmatprep.subr.mxu0 0.0
      %1803 = vmatpush1.msra.mxu0 0.0
      %1804 = vmatprep.subr.mxu0 0.0
      %1805 = vmatpush1.msra.mxu0 0.0
      %1806 = vmatprep.subr.mxu0 0.0
      %1807 = vmatpush1.msra.mxu0 0.0
      %1808 = vmatprep.subr.mxu0 0.0
      %1809 = vmatpush1.msra.mxu0 0.0
      %1810 = vmatprep.subr.mxu0 0.0
      %1811 = vmatpush1.msra.mxu0 0.0
      %1812 = vmatprep.subr.mxu0 0.0
      %1813 = vmatpush1.msra.mxu0 0.0
      %1814 = vmatprep.subr.mxu0 0.0
      %1815 = vmatpush1.msra.mxu0 0.0
      %1816 = vmatprep.subr.mxu0 0.0
      %1817 = vmatpush1.msra.mxu0 0.0
      %1818 = vmatprep.subr.mxu0 0.0
      %1819 = vmatpush1.msra.mxu0 0.0
      %1820 = vmatprep.subr.mxu0 0.0
      %1821 = vmatpush1.msra.mxu0 0.0
      %1822 = vmatprep.subr.mxu0 0.0
      %1823 = vmatpush1.msra.mxu0 0.0
      %1824 = vmatprep.subr.mxu0 0.0
      %1825 = vmatpush1.msra.mxu0 0.0
      %1826 = vmatprep.subr.mxu0 0.0
      %1827 = vmatpush1.msra.mxu0 0.0
      %1828 = vmatprep.subr.mxu0 0.0
      %1829 = vmatpush1.msra.mxu0 0.0
      %1830 = vmatprep.subr.mxu0 0.0
      %1831 = vmatpush1.msra.mxu0 0.0
      %1832 = vmatprep.mubr.f32.mxu0 0.0
      %1833 = vmatmul.mubr.f32.gmra.mrb[0].mxu0 %v1766
      %v1834 = vpop.f32.mrb[0].mxu0
      %v1835 = vadd.f32 %v1764, %v1834
      %v1836 = vpop.f32.mrb[0].mxu0
      %1837 = vdwg.mxu0
      %1838 = vmatprep.subr.mxu0 0.0
      %1839 = vmatpush1.msra.mxu0 %v291
      %1840 = vmatprep.subr.mxu0 0.0
      %1841 = vmatpush1.msra.mxu0 %v292
      %1842 = vmatprep.subr.mxu0 0.0
      %1843 = vmatpush1.msra.mxu0 %v293
      %1844 = vmatprep.subr.mxu0 0.0
      %1845 = vmatpush1.msra.mxu0 %v294
      %1846 = vmatprep.subr.mxu0 0.0
      %1847 = vmatpush1.msra.mxu0 0.0
      %1848 = vmatprep.subr.mxu0 0.0
      %1849 = vmatpush1.msra.mxu0 0.0
      %1850 = vmatprep.subr.mxu0 0.0
      %1851 = vmatpush1.msra.mxu0 0.0
      %1852 = vmatprep.subr.mxu0 0.0
      %1853 = vmatpush1.msra.mxu0 0.0
      %1854 = vmatprep.subr.mxu0 0.0
      %1855 = vmatpush1.msra.mxu0 0.0
      %1856 = vmatprep.subr.mxu0 0.0
      %1857 = vmatpush1.msra.mxu0 0.0
      %1858 = vmatprep.subr.mxu0 0.0
      %1859 = vmatpush1.msra.mxu0 0.0
      %1860 = vmatprep.subr.mxu0 0.0
      %1861 = vmatpush1.msra.mxu0 0.0
      %1862 = vmatprep.subr.mxu0 0.0
      %1863 = vmatpush1.msra.mxu0 0.0
      %1864 = vmatprep.subr.mxu0 0.0
      %1865 = vmatpush1.msra.mxu0 0.0
      %1866 = vmatprep.subr.mxu0 0.0
      %1867 = vmatpush1.msra.mxu0 0.0
      %1868 = vmatprep.subr.mxu0 0.0
      %1869 = vmatpush1.msra.mxu0 0.0
      %1870 = vmatprep.subr.mxu0 0.0
      %1871 = vmatpush1.msra.mxu0 0.0
      %1872 = vmatprep.subr.mxu0 0.0
      %1873 = vmatpush1.msra.mxu0 0.0
      %1874 = vmatprep.subr.mxu0 0.0
      %1875 = vmatpush1.msra.mxu0 0.0
      %1876 = vmatprep.subr.mxu0 0.0
      %1877 = vmatpush1.msra.mxu0 0.0
      %1878 = vmatprep.subr.mxu0 0.0
      %1879 = vmatpush1.msra.mxu0 0.0
      %1880 = vmatprep.subr.mxu0 0.0
      %1881 = vmatpush1.msra.mxu0 0.0
      %1882 = vmatprep.subr.mxu0 0.0
      %1883 = vmatpush1.msra.mxu0 0.0
      %1884 = vmatprep.subr.mxu0 0.0
      %1885 = vmatpush1.msra.mxu0 0.0
      %1886 = vmatprep.subr.mxu0 0.0
      %1887 = vmatpush1.msra.mxu0 0.0
      %1888 = vmatprep.subr.mxu0 0.0
      %1889 = vmatpush1.msra.mxu0 0.0
      %1890 = vmatprep.subr.mxu0 0.0
      %1891 = vmatpush1.msra.mxu0 0.0
      %1892 = vmatprep.subr.mxu0 0.0
      %1893 = vmatpush1.msra.mxu0 0.0
      %1894 = vmatprep.subr.mxu0 0.0
      %1895 = vmatpush1.msra.mxu0 0.0
      %1896 = vmatprep.subr.mxu0 0.0
      %1897 = vmatpush1.msra.mxu0 0.0
      %1898 = vmatprep.subr.mxu0 0.0
      %1899 = vmatpush1.msra.mxu0 0.0
      %1900 = vmatprep.subr.mxu0 0.0
      %1901 = vmatpush1.msra.mxu0 0.0
      %1902 = vmatprep.mubr.f32.mxu0 0.0
      %1903 = vmatmul.mubr.f32.gmra.mrb[0].mxu0 %v1378
      %v1904 = vpop.f32.mrb[0].mxu0
      %v1905 = vadd.f32 0.0, %v1904
      %v1906 = vpop.f32.mrb[0].mxu0
      %1907 = vdwg.mxu0
      %v1909 = vcombine.high %v1905, %v1905
      %v1911 = vunpack.c.l.s4 1966171168
      %v1912 = vunpack.c.0.s8 %v1911
      %v1913 = vlaneseq
      %v1914 = vshrl.u32 %v1913, 7
      %v1915 = vsub.s32 %v1912, %v1914
      %v1916 = vrot.slane %v1905, %v1915
      %v1918 = vunpack.c.l.s4 1966171168
      %v1919 = vunpack.c.0.s8 %v1918
      %v1920 = vlaneseq
      %v1921 = vshrl.u32 %v1920, 7
      %v1922 = vsub.s32 %v1919, %v1921
      %v1923 = vrot.slane %v1909, %v1922
      %v1924 = vcombine.high %v1916, %v1916
      %v1925 = vcombine.high %v1923, %v1923
      %v1927 = vunpack.c.l.s4 1966171168
      %v1928 = vunpack.c.0.s8 %v1927
      %v1929 = vlaneseq
      %v1930 = vshrl.u32 %v1929, 7
      %v1931 = vsub.s32 %v1928, %v1930
      %v1932 = vrot.slane %v1916, %v1931
      %v1934 = vunpack.c.l.s4 1966171168
      %v1935 = vunpack.c.0.s8 %v1934
      %v1936 = vlaneseq
      %v1937 = vshrl.u32 %v1936, 7
      %v1938 = vsub.s32 %v1935, %v1937
      %v1939 = vrot.slane %v1923, %v1938
      %v1941 = vunpack.c.l.s4 1966171168
      %v1942 = vunpack.c.0.s8 %v1941
      %v1943 = vlaneseq
      %v1944 = vshrl.u32 %v1943, 7
      %v1945 = vsub.s32 %v1942, %v1944
      %v1946 = vrot.slane %v1924, %v1945
      %v1948 = vunpack.c.l.s4 1966171168
      %v1949 = vunpack.c.0.s8 %v1948
      %v1950 = vlaneseq
      %v1951 = vshrl.u32 %v1950, 7
      %v1952 = vsub.s32 %v1949, %v1951
      %v1953 = vrot.slane %v1925, %v1952
      %v1954 = vcombine.high %v1932, %v1932
      %v1955 = vcombine.high %v1939, %v1939
      %v1956 = vcombine.high %v1946, %v1946
      %v1957 = vcombine.high %v1953, %v1953
      %v1958 = vlaneseq
      %v1959 = vshrl.u32 %v1958, 7
      %v1960 = vsub.s32 0, %v1959
      %v1961 = vrot.slane %v1932, %v1960
      %v1962 = vlaneseq
      %v1963 = vshrl.u32 %v1962, 7
      %v1964 = vsub.s32 0, %v1963
      %v1965 = vrot.slane %v1946, %v1964
      %v1966 = vlaneseq
      %v1967 = vshrl.u32 %v1966, 7
      %v1968 = vsub.s32 0, %v1967
      %v1969 = vrot.slane %v1954, %v1968
      %v1970 = vlaneseq
      %v1971 = vshrl.u32 %v1970, 7
      %v1972 = vsub.s32 0, %v1971
      %v1973 = vrot.slane %v1956, %v1972
      %v1974 = vlaneseq
      %v1975 = vshrl.u32 %v1974, 7
      %v1976 = vsub.s32 0, %v1975
      %v1977 = vrot.slane %v1939, %v1976
      %v1978 = vlaneseq
      %v1979 = vshrl.u32 %v1978, 7
      %v1980 = vsub.s32 0, %v1979
      %v1981 = vrot.slane %v1953, %v1980
      %v1982 = vlaneseq
      %v1983 = vshrl.u32 %v1982, 7
      %v1984 = vsub.s32 0, %v1983
      %v1985 = vrot.slane %v1955, %v1984
      %v1986 = vlaneseq
      %v1987 = vshrl.u32 %v1986, 7
      %v1988 = vsub.s32 0, %v1987
      %v1989 = vrot.slane %v1957, %v1988
      %1998 = vrot.lane.b32.xlu0 %v1905, 64
      %v1999 = vpop.permute.xlu0 %1998
      %v2001 = vadd.f32 %v1961, %v1999
      %v2002 = vadd.f32 %v1965, %v1999
      %v2003 = vadd.f32 %v1969, %v1999
      %v2004 = vadd.f32 %v1973, %v1999
      %v2005 = vadd.f32 %v1977, %v1999
      %v2006 = vadd.f32 %v1981, %v1999
      %v2007 = vadd.f32 %v1985, %v1999
      %v2008 = vadd.f32 %v1989, %v1999
      %v2009 = vlaneseq
      %v2010 = vshrl.u32 %v2009, 7
      %v2011 = vsub.s32 0, %v2010
      %v2012 = vrot.slane %v270, %v2011
      %v2013 = vadd.f32 %v2001, %v2012
      %v2014 = vadd.f32 %v2002, %v2012
      %v2015 = vadd.f32 %v2003, %v2012
      %v2016 = vadd.f32 %v2004, %v2012
      %v2017 = vadd.f32 %v2005, %v2012
      %v2018 = vadd.f32 %v2006, %v2012
      %v2019 = vadd.f32 %v2007, %v2012
      %v2020 = vadd.f32 %v2008, %v2012
      %v2021 = vmax.f32 %v2013, 0.0
      %v2022 = vmax.f32 %v2014, 0.0
      %v2023 = vmax.f32 %v2015, 0.0
      %v2024 = vmax.f32 %v2016, 0.0
      %v2025 = vmax.f32 %v2017, 0.0
      %v2026 = vmax.f32 %v2018, 0.0
      %v2027 = vmax.f32 %v2019, 0.0
      %v2028 = vmax.f32 %v2020, 0.0
      %v2029 = vsel %vm685, %v2021, 0.0
      %2030 = vadd.xlane.f32.xlu0 %v2029
      %v2031 = vpop.xlane.xlu0 %2030
      %v2032 = vsel %vm685, %v2022, 0.0
      %2033 = vadd.xlane.f32.xlu0 %v2032
      %v2034 = vpop.xlane.xlu0 %2033
      %v2035 = vsel %vm685, %v2023, 0.0
      %2036 = vadd.xlane.f32.xlu0 %v2035
      %v2037 = vpop.xlane.xlu0 %2036
      %v2038 = vsel %vm685, %v2024, 0.0
      %2039 = vadd.xlane.f32.xlu0 %v2038
      %v2040 = vpop.xlane.xlu0 %2039
      %v2041 = vsel %vm685, %v2025, 0.0
      %2042 = vadd.xlane.f32.xlu0 %v2041
      %v2043 = vpop.xlane.xlu0 %2042
      %v2044 = vsel %vm685, %v2026, 0.0
      %2045 = vadd.xlane.f32.xlu0 %v2044
      %v2046 = vpop.xlane.xlu0 %2045
      %v2047 = vsel %vm685, %v2027, 0.0
      %2048 = vadd.xlane.f32.xlu0 %v2047
      %v2049 = vpop.xlane.xlu0 %2048
      %v2050 = vsel %vm685, %v2028, 0.0
      %2051 = vadd.xlane.f32.xlu0 %v2050
      %v2052 = vpop.xlane.xlu0 %2051
      %v2053 = vmul.f32 %v2031, %v1454
      %v2054 = vmul.f32 %v2034, %v1454
      %v2055 = vmul.f32 %v2037, %v1454
      %v2056 = vmul.f32 %v2040, %v1454
      %v2057 = vmul.f32 %v2043, %v1454
      %v2058 = vmul.f32 %v2046, %v1454
      %v2059 = vmul.f32 %v2049, %v1454
      %v2060 = vmul.f32 %v2052, %v1454
      %v2061 = vsub.f32 %v2021, %v2053
      %v2062 = vsub.f32 %v2022, %v2054
      %v2063 = vsub.f32 %v2023, %v2055
      %v2064 = vsub.f32 %v2024, %v2056
      %v2065 = vsub.f32 %v2025, %v2057
      %v2066 = vsub.f32 %v2026, %v2058
      %v2067 = vsub.f32 %v2027, %v2059
      %v2068 = vsub.f32 %v2028, %v2060
      %v2069 = vmul.f32 %v2061, %v2061
      %v2070 = vmul.f32 %v2062, %v2062
      %v2071 = vmul.f32 %v2063, %v2063
      %v2072 = vmul.f32 %v2064, %v2064
      %v2073 = vmul.f32 %v2065, %v2065
      %v2074 = vmul.f32 %v2066, %v2066
      %v2075 = vmul.f32 %v2067, %v2067
      %v2076 = vmul.f32 %v2068, %v2068
      %v2077 = vsel %vm685, %v2069, 0.0
      %2078 = vadd.xlane.f32.xlu0 %v2077
      %v2079 = vpop.xlane.xlu0 %2078
      %v2080 = vsel %vm685, %v2070, 0.0
      %2081 = vadd.xlane.f32.xlu0 %v2080
      %v2082 = vpop.xlane.xlu0 %2081
      %v2083 = vsel %vm685, %v2071, 0.0
      %2084 = vadd.xlane.f32.xlu0 %v2083
      %v2085 = vpop.xlane.xlu0 %2084
      %v2086 = vsel %vm685, %v2072, 0.0
      %2087 = vadd.xlane.f32.xlu0 %v2086
      %v2088 = vpop.xlane.xlu0 %2087
      %v2089 = vsel %vm685, %v2073, 0.0
      %2090 = vadd.xlane.f32.xlu0 %v2089
      %v2091 = vpop.xlane.xlu0 %2090
      %v2092 = vsel %vm685, %v2074, 0.0
      %2093 = vadd.xlane.f32.xlu0 %v2092
      %v2094 = vpop.xlane.xlu0 %2093
      %v2095 = vsel %vm685, %v2075, 0.0
      %2096 = vadd.xlane.f32.xlu0 %v2095
      %v2097 = vpop.xlane.xlu0 %2096
      %v2098 = vsel %vm685, %v2076, 0.0
      %2099 = vadd.xlane.f32.xlu0 %v2098
      %v2100 = vpop.xlane.xlu0 %2099
      %v2101 = vmul.f32 %v2079, %v1454
      %v2102 = vmul.f32 %v2082, %v1454
      %v2103 = vmul.f32 %v2085, %v1454
      %v2104 = vmul.f32 %v2088, %v1454
      %v2105 = vmul.f32 %v2091, %v1454
      %v2106 = vmul.f32 %v2094, %v1454
      %v2107 = vmul.f32 %v2097, %v1454
      %v2108 = vmul.f32 %v2100, %v1454
      %v2109 = vadd.f32 %v2101, 1e-05
      %v2110 = vadd.f32 %v2102, 1e-05
      %v2111 = vadd.f32 %v2103, 1e-05
      %v2112 = vadd.f32 %v2104, 1e-05
      %v2113 = vadd.f32 %v2105, 1e-05
      %v2114 = vadd.f32 %v2106, 1e-05
      %v2115 = vadd.f32 %v2107, 1e-05
      %v2116 = vadd.f32 %v2108, 1e-05
      %v2117 = vrsqrt.pop %v2109
      %v2118 = vrsqrt.pop %v2110
      %v2119 = vrsqrt.pop %v2111
      %v2120 = vrsqrt.pop %v2112
      %v2121 = vrsqrt.pop %v2113
      %v2122 = vrsqrt.pop %v2114
      %v2123 = vrsqrt.pop %v2115
      %v2124 = vrsqrt.pop %v2116
      %v2125 = vmul.f32 %v2061, %v2117
      %v2126 = vmul.f32 %v2062, %v2118
      %v2127 = vmul.f32 %v2063, %v2119
      %v2128 = vmul.f32 %v2064, %v2120
      %v2129 = vmul.f32 %v2065, %v2121
      %v2130 = vmul.f32 %v2066, %v2122
      %v2131 = vmul.f32 %v2067, %v2123
      %v2132 = vmul.f32 %v2068, %v2124
      %v2133 = vlaneseq
      %v2134 = vshrl.u32 %v2133, 7
      %v2135 = vsub.s32 1, %v2134
      %v2136 = vrot.slane %v270, %v2135
      %v2137 = vmul.f32 %v2125, %v2136
      %v2138 = vmul.f32 %v2126, %v2136
      %v2139 = vmul.f32 %v2127, %v2136
      %v2140 = vmul.f32 %v2128, %v2136
      %v2141 = vmul.f32 %v2129, %v2136
      %v2142 = vmul.f32 %v2130, %v2136
      %v2143 = vmul.f32 %v2131, %v2136
      %v2144 = vmul.f32 %v2132, %v2136
      %v2145 = vlaneseq
      %v2146 = vshrl.u32 %v2145, 7
      %v2147 = vsub.s32 2, %v2146
      %v2148 = vrot.slane %v270, %v2147
      %v2149 = vadd.f32 %v2137, %v2148
      %v2150 = vadd.f32 %v2138, %v2148
      %v2151 = vadd.f32 %v2139, %v2148
      %v2152 = vadd.f32 %v2140, %v2148
      %v2153 = vadd.f32 %v2141, %v2148
      %v2154 = vadd.f32 %v2142, %v2148
      %v2155 = vadd.f32 %v2143, %v2148
      %v2156 = vadd.f32 %v2144, %v2148
      %v2157 = vlaneseq
      %v2158 = vshrl.u32 %v2157, 7
      %v2159 = vsub.s32 6, %v2158
      %v2160 = vrot.slane %v270, %v2159
      %v2161 = vmul.f32 %v2149, %v2160
      %v2162 = vmul.f32 %v2150, %v2160
      %v2163 = vmul.f32 %v2151, %v2160
      %v2164 = vmul.f32 %v2152, %v2160
      %v2165 = vmul.f32 %v2153, %v2160
      %v2166 = vmul.f32 %v2154, %v2160
      %v2167 = vmul.f32 %v2155, %v2160
      %v2168 = vmul.f32 %v2156, %v2160
      %v2169 = vsel %vm685, %v2161, 0.0
      %2170 = vadd.xlane.f32.xlu0 %v2169
      %v2171 = vpop.xlane.xlu0 %2170
      %v2172 = vsel %vm685, %v2162, 0.0
      %2173 = vadd.xlane.f32.xlu0 %v2172
      %v2174 = vpop.xlane.xlu0 %2173
      %v2175 = vsel %vm685, %v2163, 0.0
      %2176 = vadd.xlane.f32.xlu0 %v2175
      %v2177 = vpop.xlane.xlu0 %2176
      %v2178 = vsel %vm685, %v2164, 0.0
      %2179 = vadd.xlane.f32.xlu0 %v2178
      %v2180 = vpop.xlane.xlu0 %2179
      %v2181 = vsel %vm685, %v2165, 0.0
      %2182 = vadd.xlane.f32.xlu0 %v2181
      %v2183 = vpop.xlane.xlu0 %2182
      %v2184 = vsel %vm685, %v2166, 0.0
      %2185 = vadd.xlane.f32.xlu0 %v2184
      %v2186 = vpop.xlane.xlu0 %2185
      %v2187 = vsel %vm685, %v2167, 0.0
      %2188 = vadd.xlane.f32.xlu0 %v2187
      %v2189 = vpop.xlane.xlu0 %2188
      %v2190 = vsel %vm685, %v2168, 0.0
      %2191 = vadd.xlane.f32.xlu0 %v2190
      %v2192 = vpop.xlane.xlu0 %2191
      %v2194 = vrot.slane %v270, 3
      %s2195 = vtos %v2194
      %v2196 = vstv %s2195
      %v2198 = vadd.f32 %v2171, %v2196
      %v2199 = vadd.f32 %v2174, %v2196
      %v2200 = vadd.f32 %v2177, %v2196
      %v2201 = vadd.f32 %v2180, %v2196
      %v2202 = vadd.f32 %v2183, %v2196
      %v2203 = vadd.f32 %v2186, %v2196
      %v2204 = vadd.f32 %v2189, %v2196
      %v2205 = vadd.f32 %v2192, %v2196
      %v2206 = vsel %vm1656, %v1835, 0.0
      %v2215 = vlaneseq
      %v2216 = vshrl.u32 %v2215, 7
      %v2217 = vsub.s32 %v352, %v2216
      %v2218 = vrot.slane %v2198, %v2217
      %v2219 = vlaneseq
      %v2220 = vshrl.u32 %v2219, 7
      %v2221 = vsub.s32 %v352, %v2220
      %v2222 = vrot.slane %v2199, %v2221
      %v2223 = vlaneseq
      %v2224 = vshrl.u32 %v2223, 7
      %v2225 = vsub.s32 %v352, %v2224
      %v2226 = vrot.slane %v2200, %v2225
      %v2227 = vlaneseq
      %v2228 = vshrl.u32 %v2227, 7
      %v2229 = vsub.s32 %v352, %v2228
      %v2230 = vrot.slane %v2201, %v2229
      %v2231 = vlaneseq
      %v2232 = vshrl.u32 %v2231, 7
      %v2233 = vsub.s32 %v352, %v2232
      %v2234 = vrot.slane %v2202, %v2233
      %v2235 = vlaneseq
      %v2236 = vshrl.u32 %v2235, 7
      %v2237 = vsub.s32 %v352, %v2236
      %v2238 = vrot.slane %v2203, %v2237
      %v2239 = vlaneseq
      %v2240 = vshrl.u32 %v2239, 7
      %v2241 = vsub.s32 %v352, %v2240
      %v2242 = vrot.slane %v2204, %v2241
      %v2243 = vlaneseq
      %v2244 = vshrl.u32 %v2243, 7
      %v2245 = vsub.s32 %v352, %v2244
      %v2246 = vrot.slane %v2205, %v2245
      %v2247 = vsel %vm750, %v2222, %v2218
      %v2248 = vsel %vm752, %v2226, %v2247
      %v2249 = vsel %vm754, %v2230, %v2248
      %v2250 = vsel %vm756, %v2234, %v2249
      %v2251 = vsel %vm758, %v2238, %v2250
      %v2252 = vsel %vm760, %v2242, %v2251
      %v2253 = vsel %vm762, %v2246, %v2252
      %v2255 = vsel %vm766, %v2253, 0.0
      %2257 = vrot.lane.b32.xlu0 %v2206, 64
      %v2258 = vpop.permute.xlu0 %2257
      %2261 = vrot.lane.b32.xlu0 %v2255, 96
      %v2262 = vpop.permute.xlu0 %2261
      %v2264 = vsel %vm685, %v1356, %v2258
      %v2265 = vsel %vm1663, %v2264, %v2262
      %2267 = vrot.lane.b32.xlu0 %v1361, 64
      %v2268 = vpop.permute.xlu0 %2267
      %v2270 = vsel %vm685, %v2268, 0.0
      %vm2271 = vcmask 1040384
      %v2272 = vsel %vm2271, %v2270, 0.0
      %2273 = vst [vmem:[%s265] sm:$0xff] %v2265
      %2274 = vst [vmem:[%s265 + $0x8] sm:$0xff] %v2272
      %p2275 = scmp.lt.s32.totalorder %s17, 3
      %s2276 = scalar_select %p2275, %s17, 3
      %s2277 = smul.addr %s2276, 2
      %s2278 = smul.addr %s2277, 8
      %s2279 = scalar_lea.vmem %s6, %s2278
      // Predicated region
      $region45: #{molecular_gvae_forward.1} parent=43 // pred_check
        %p2280 = pneg %p171
      $region46: #{molecular_gvae_forward.1} parent=43 // pred_check_branch
        %2282 = sbr.rel (%p2280) target = $region48
      $region47: #{molecular_gvae_forward.1} parent=43 // pred_region
        _
      $region48: #{molecular_gvae_forward.1} parent=43 // pred_fallthru
        _
    $region44: #{molecular_gvae_forward.1} parent=5 // pred_fallthru
      _
    %p2283 = scmp.le.s32.totalorder 2, %s12
    // Predicated region
    $region49: #{molecular_gvae_forward.1} parent=5 // pred_check
      %p2284 = pneg %p2283
    $region50: #{molecular_gvae_forward.1} parent=5 // pred_check_branch
      %2286 = sbr.rel (%p2284) target = $region52
    $region51: #{molecular_gvae_forward.1} parent=5 // pred_region
      %s2287 = ssub.s32 %s12, 2
      // Predicated region
      $region53: #{molecular_gvae_forward.1} parent=51 // pred_check
        %p2288 = pneg %p177
      $region54: #{molecular_gvae_forward.1} parent=51 // pred_check_branch
        %2290 = sbr.rel (%p2288) target = $region56
      $region55: #{molecular_gvae_forward.1} parent=51 // pred_region
        %p2291 = scmp.lt.s32.totalorder %s18, 3
        %s2292 = scalar_select %p2291, %s18, 3
        %s2293 = smul.addr %s2292, 2
        %s2294 = smul.addr %s2293, 8
        %s2295 = scalar_lea.vmem %s6, %s2294
      $region56: #{molecular_gvae_forward.1} parent=51 // pred_fallthru
        _
    $region52: #{molecular_gvae_forward.1} parent=5 // pred_fallthru
      _
  $region6: #{molecular_gvae_forward.1} parent=0 // loop_footer
    %s16 = sadd.s32 1, %s12
  $region7: #{molecular_gvae_forward.1} parent=0 // loop_footer_branch
    %11 = sbr.rel target = $region3
  $region8: #{molecular_gvae_forward.1} parent=0 // loop_exit
    _

</llo_original>
